<compile_context>
chip_gen: v7x
topology: tpu7x:2x2x1
jax: 0.10.0
libtpu: 0.0.40
codegen_flags: <defaults>
</compile_context>

<pallas_src>
import math

import jax
import jax.numpy as jnp
from jax.experimental import pallas as pl
from jax.experimental.pallas import tpu as pltpu

EPS = 1e-5  # BatchNorm1d default eps

FEATURES_CHANNELS = (32, 16, 8)
NUM_POINTS = (24, 48, 96)
REDUCTION = 2
STAGES = 3

_HI = jax.lax.Precision.HIGHEST  # reference only


# ---------------------------------------------------------------------------
# Pallas kernel
# ---------------------------------------------------------------------------
def _router_kernel(x_ref, w1_ref, b1_ref, w2_ref, b2_ref, wbar_ref, out_ref):
    # x_ref: (TBN, C*P) block of flat per-sample features (f32 or bf16).
    X = x_ref[...]
    if X.dtype != jnp.bfloat16:          # static dtype check: no-op for bf16 input
        X = X.astype(jnp.bfloat16)

    # conv1(k=3,pad=1) + BN1 (folded) + ReLU  — single K=768 MXU dot.
    h1 = jnp.dot(X, w1_ref[...], preferred_element_type=jnp.float32)
    h1 = jnp.maximum(h1 + b1_ref[...], 0.0)                    # (TBN, F1) f32

    # conv2(k=1) + BN2 (folded) + ReLU (lane-padded to F2P=128; column F2 is a
    # constant-1 channel carrying the Linear bias).
    h2 = jnp.dot(h1.astype(jnp.bfloat16), w2_ref[...],
                 preferred_element_type=jnp.float32)
    h2 = jnp.maximum(h2 + b2_ref[...], 0.0)                    # (TBN, F2P) f32

    # Linear + mean-over-P-outputs folded into a weighted lane reduce (f32);
    # bbar rides on the constant-1 padded column, so no extra add is needed.
    logit = jnp.sum(h2 * wbar_ref[...], axis=1, keepdims=True)  # (TBN, 1)
    out_ref[...] = jax.nn.sigmoid(logit).astype(out_ref.dtype)


# ---------------------------------------------------------------------------
# Parameters (deterministic, mimicking the PyTorch init shapes; BN stats are
# randomized so the inference-mode BN folding is actually exercised)
# ---------------------------------------------------------------------------
def init_stage_params(key, stage):
    C = FEATURES_CHANNELS[stage]
    P = NUM_POINTS[stage]
    Cmid = C // REDUCTION
    C2 = C // FEATURES_CHANNELS[-1]
    keys = jax.random.split(key, 12)

    bnd1 = 1.0 / math.sqrt(C * 3)
    w1 = jax.random.uniform(keys[0], (Cmid, C, 3), jnp.float32, -bnd1, bnd1)
    bnd2 = 1.0 / math.sqrt(Cmid)
    w2 = jax.random.uniform(keys[1], (C2, Cmid, 1), jnp.float32, -bnd2, bnd2)

    fan_in = C2 * P
    gain = 5.0 / 3.0                                         # tanh gain
    bound = gain * math.sqrt(6.0 / (fan_in + P))             # xavier_uniform
    wl = jax.random.uniform(keys[2], (P, fan_in), jnp.float32, -bound, bound)
    bb = 1.0 / math.sqrt(fan_in)
    bl = jax.random.uniform(keys[3], (P,), jnp.float32, -bb, bb)

    def bn(n, k0, k1, k2, k3):
        return dict(gamma=jax.random.uniform(k0, (n,), jnp.float32, 0.5, 1.5),
                    beta=jax.random.uniform(k1, (n,), jnp.float32, -0.5, 0.5),
                    mean=jax.random.normal(k2, (n,), jnp.float32) * 0.3,
                    var=jax.random.uniform(k3, (n,), jnp.float32, 0.5, 1.5))

    return dict(w1=w1, bn1=bn(Cmid, *keys[4:8]),
                w2=w2, bn2=bn(C2, *keys[8:12]), wl=wl, bl=bl)


# ---------------------------------------------------------------------------
# Wrapper: weight folding (done once) + pallas_call
# ---------------------------------------------------------------------------
def _pick_tbn(bn, requested=None):
    """Samples (rows) per grid step.  Multiples of 8 keep blocks sublane
    aligned.  No forced halving: on single-TC chips (v5e/v6e) extra grid steps
    are pure overhead; on v7x choose a tbn that leaves >= 2 blocks if BN is
    large (cap 512 already does this for BN >= 1024)."""
    if requested is not None:
        assert bn % requested == 0, "tbn must divide B*N"
        assert requested % 8 == 0 or requested == bn, "tbn must be a multiple of 8"
        return requested
    cap = min(512, bn)
    t = cap - cap % 8
    while t >= 8:
        if bn % t == 0:
            return t
        t -= 8
    return bn  # full-extent block (always a legal block shape)


def adaptive_router_forward(xs, params, stage, tbn=None):
    """xs: (B, N, C, P) float32 or bfloat16 (PyTorch layout).  Returns (B, N, 1)."""
    B, N, C, P = xs.shape
    assert C == FEATURES_CHANNELS[stage] and P == NUM_POINTS[stage]
    BN = B * N
    Cmid = C // REDUCTION
    C2 = C // FEATURES_CHANNELS[-1]
    CP, F1, F2 = C * P, Cmid * P, C2 * P          # 768, 384, 96 for every stage
    F2P = pl.cdiv(F2 + 1, 128) * 128              # lane-pad + 1 spare bias column

    tbn = _pick_tbn(BN, tbn)
    nblk = BN // tbn
    p = params

    # ---- fold Conv1d(k=3, pad=1, no bias) + BN1 into a dense (CP, F1) matrix.
    # W1full[c*P + pin, o*P + pout] = w1[o, c, k] with pin = pout + k - 1
    # (zero padding handled by the banded eye matrices).
    shifts = [jnp.eye(P, P, k=1 - k, dtype=jnp.float32) for k in range(3)]
    W1full = sum(jnp.einsum('oc,pq->cpoq', p['w1'][:, :, k], shifts[k])
                 for k in range(3)).reshape(CP, F1)
    s1 = p['bn1']['gamma'] * jax.lax.rsqrt(p['bn1']['var'] + EPS)       # (Cmid,)
    W1f = W1full * jnp.repeat(s1, P)[None, :]
    b1f = jnp.repeat(p['bn1']['beta'] - p['bn1']['mean'] * s1, P)[None, :]

    # ---- fold Conv1d(k=1, no bias) + BN2 into a dense (F1, F2) matrix,
    # lane-padded to F2P with exact-zero columns.
    W2full = jnp.einsum('ao,pq->opaq', p['w2'][:, :, 0],
                        jnp.eye(P, dtype=jnp.float32)).reshape(F1, F2)
    s2 = p['bn2']['gamma'] * jax.lax.rsqrt(p['bn2']['var'] + EPS)       # (C2,)
    W2f = W2full * jnp.repeat(s2, P)[None, :]
    b2f = jnp.repeat(p['bn2']['beta'] - p['bn2']['mean'] * s2, P)[None, :]

    # ---- fold Linear + mean over the P outputs (exact; mean is linear).
    wbar = jnp.mean(p['wl'], axis=0)[None, :]                           # (1, F2)
    bbar = jnp.mean(p['bl'])                                            # scalar

    # Pad to F2P lanes.  Column F2 is a constant-1 channel (W2f col = 0,
    # b2f = 1 -> h2[:, F2] == 1 after ReLU) that carries bbar through wbar.
    W2f_p = jnp.zeros((F1, F2P), jnp.float32).at[:, :F2].set(W2f)
    b2f_p = (jnp.zeros((1, F2P), jnp.float32).at[:, :F2].set(b2f)
             .at[0, F2].set(1.0))
    wbar_p = (jnp.zeros((1, F2P), jnp.float32).at[:, :F2].set(wbar)
              .at[0, F2].set(bbar))

    # Pure metadata reshape (no transpose, no dtype cast / extra HBM pass):
    # x2d[b*N + n, c*P + p] == xs[b, n, c, p]
    x2d = xs.reshape(BN, CP)

    out = pl.pallas_call(
        _router_kernel,
        out_shape=jax.ShapeDtypeStruct((BN, 1), jnp.float32),
        grid_spec=pltpu.PrefetchScalarGridSpec(
            num_scalar_prefetch=0,
            grid=(nblk,),
            in_specs=[
                pl.BlockSpec((tbn, CP), lambda i: (i, 0)),     # activations
                pl.BlockSpec((CP, F1), lambda i: (0, 0)),      # W1f (bf16)
                pl.BlockSpec((1, F1), lambda i: (0, 0)),       # b1f (f32)
                pl.BlockSpec((F1, F2P), lambda i: (0, 0)),     # W2f (bf16, padded)
                pl.BlockSpec((1, F2P), lambda i: (0, 0)),      # b2f (f32, padded)
                pl.BlockSpec((1, F2P), lambda i: (0, 0)),      # wbar (f32, + bbar)
            ],
            out_specs=pl.BlockSpec((tbn, 1), lambda i: (i, 0)),
        ),
        compiler_params=pltpu.CompilerParams(dimension_semantics=("parallel",)),
    )(x2d, W1f.astype(jnp.bfloat16), b1f, W2f_p.astype(jnp.bfloat16), b2f_p,
      wbar_p)

    return out.reshape(B, N, 1)


# ---------------------------------------------------------------------------
# Pure-JAX reference (mirrors the PyTorch forward, inference-mode BN)
# ---------------------------------------------------------------------------
def reference_forward(xs, params, stage):
    B, N, C, P = xs.shape
    Cmid = C // REDUCTION
    C2 = C // FEATURES_CHANNELS[-1]
    x = xs.reshape(B * N, C, P).astype(jnp.float32)
    p = params

    xpad = jnp.pad(x, ((0, 0), (0, 0), (1, 1)))
    h1 = jnp.zeros((B * N, Cmid, P), jnp.float32)
    for k in range(3):
        h1 = h1 + jnp.einsum('bip,oi->bop', xpad[:, :, k:k + P], p['w1'][:, :, k],
                             precision=_HI)

    def bn(h, q):
        s = q['gamma'] / jnp.sqrt(q['var'] + EPS)
        return (h - q['mean'][None, :, None]) * s[None, :, None] + q['beta'][None, :, None]

    h1 = jax.nn.relu(bn(h1, p['bn1']))
    h2 = jnp.einsum('bip,oi->bop', h1, p['w2'][:, :, 0], precision=_HI)
    h2 = jax.nn.relu(bn(h2, p['bn2']))
    flat = h2.reshape(B * N, C2 * P)
    logits = jnp.dot(flat, p['wl'].T, precision=_HI) + p['bl']
    score = jnp.mean(logits.reshape(B, N, -1), axis=-1, keepdims=True)
    return jax.nn.sigmoid(score)


if __name__ == "__main__":
    key = jax.random.PRNGKey(0)
    B, Nlanes = 2, 8
    for stage in range(STAGES):
        kp, kx, key = jax.random.split(key, 3)
        params = init_stage_params(kp, stage)
        C = FEATURES_CHANNELS[stage]
        P = NUM_POINTS[stage]
        xs = jax.random.normal(kx, (B, Nlanes, C, P), jnp.float32)

        out = adaptive_router_forward(xs, params, stage)
        out = jax.block_until_ready(out)
        assert out.shape == (B, Nlanes, 1)

        ref = reference_forward(xs, params, stage)
        err = float(jnp.max(jnp.abs(out - ref)))
        # bf16 MXU dots with f32 accumulation vs. an f32-HIGHEST reference;
        # the sigmoid compresses the logit error, so 2e-3 is a comfortable bound.
        if err > 2e-3:
            raise AssertionError(f"stage {stage}: max abs err {err}")
    print("KERNEL_OK")
</pallas_src>

<mosaic_0001>
module attributes {stable_mosaic.version = 11 : i64} {
  func.func @_router_kernel(%arg0: i32, %arg1: memref<16x768xf32, #tpu.memory_space<vmem>>, %arg2: memref<768x384xbf16, #tpu.memory_space<vmem>>, %arg3: memref<1x384xf32, #tpu.memory_space<vmem>>, %arg4: memref<384x128xbf16, #tpu.memory_space<vmem>>, %arg5: memref<1x128xf32, #tpu.memory_space<vmem>>, %arg6: memref<1x128xf32, #tpu.memory_space<vmem>>, %arg7: memref<16x1xf32, #tpu.memory_space<vmem>>) attributes {dimension_semantics = [#tpu.dimension_semantics<parallel>], iteration_bounds = array<i64: 1>, scalar_prefetch = 0 : i64, scratch_operands = 0 : i64, tpu.core_type = #tpu.core_type<tc>, window_params = [{transform_indices = @transform_0, window_bounds = array<i64: 16, 768>}, {pipeline_mode = #tpu.pipeline_mode<synchronous>, transform_indices = @transform_1, window_bounds = array<i64: 768, 384>}, {pipeline_mode = #tpu.pipeline_mode<synchronous>, transform_indices = @transform_2, window_bounds = array<i64: 1, 384>}, {pipeline_mode = #tpu.pipeline_mode<synchronous>, transform_indices = @transform_3, window_bounds = array<i64: 384, 128>}, {pipeline_mode = #tpu.pipeline_mode<synchronous>, transform_indices = @transform_4, window_bounds = array<i64: 1, 128>}, {pipeline_mode = #tpu.pipeline_mode<synchronous>, transform_indices = @transform_5, window_bounds = array<i64: 1, 128>}, {transform_indices = @transform_6, window_bounds = array<i64: 16, 1>}]} {
    %c0 = arith.constant 0 : index
    %c0_0 = arith.constant 0 : index
    %0 = vector.load %arg1[%c0, %c0_0] : memref<16x768xf32, #tpu.memory_space<vmem>>, vector<16x768xf32>
    %1 = arith.truncf %0 : vector<16x768xf32> to vector<16x768xbf16>
    %c0_1 = arith.constant 0 : index
    %c0_2 = arith.constant 0 : index
    %2 = vector.load %arg2[%c0_1, %c0_2] : memref<768x384xbf16, #tpu.memory_space<vmem>>, vector<768x384xbf16>
    %cst = arith.constant dense<0.000000e+00> : vector<16x384xf32>
    %3 = tpu.matmul %1, %2, %cst {dimension_numbers = #tpu.dot_dimension_numbers<[1], [0], [0], [1], [0, 0, 1, 1], [], []>} : vector<16x768xbf16>, vector<768x384xbf16>, vector<16x384xf32> -> vector<16x384xf32>
    %c0_3 = arith.constant 0 : index
    %c0_4 = arith.constant 0 : index
    %4 = vector.load %arg3[%c0_3, %c0_4] : memref<1x384xf32, #tpu.memory_space<vmem>>, vector<1x384xf32>
    %5 = vector.broadcast %4 : vector<1x384xf32> to vector<16x384xf32>
    %6 = arith.addf %3, %5 : vector<16x384xf32>
    %cst_5 = arith.constant 0.000000e+00 : f32
    %7 = vector.broadcast %cst_5 : f32 to vector<16x384xf32>
    %8 = arith.maximumf %6, %7 : vector<16x384xf32>
    %9 = arith.truncf %8 : vector<16x384xf32> to vector<16x384xbf16>
    %c0_6 = arith.constant 0 : index
    %c0_7 = arith.constant 0 : index
    %10 = vector.load %arg4[%c0_6, %c0_7] : memref<384x128xbf16, #tpu.memory_space<vmem>>, vector<384x128xbf16>
    %cst_8 = arith.constant dense<0.000000e+00> : vector<16x128xf32>
    %11 = tpu.matmul %9, %10, %cst_8 {dimension_numbers = #tpu.dot_dimension_numbers<[1], [0], [0], [1], [0, 0, 1, 1], [], []>} : vector<16x384xbf16>, vector<384x128xbf16>, vector<16x128xf32> -> vector<16x128xf32>
    %c0_9 = arith.constant 0 : index
    %c0_10 = arith.constant 0 : index
    %12 = vector.load %arg5[%c0_9, %c0_10] : memref<1x128xf32, #tpu.memory_space<vmem>>, vector<1x128xf32>
    %13 = vector.broadcast %12 : vector<1x128xf32> to vector<16x128xf32>
    %14 = arith.addf %11, %13 : vector<16x128xf32>
    %cst_11 = arith.constant 0.000000e+00 : f32
    %15 = vector.broadcast %cst_11 : f32 to vector<16x128xf32>
    %16 = arith.maximumf %14, %15 : vector<16x128xf32>
    %c0_12 = arith.constant 0 : index
    %c0_13 = arith.constant 0 : index
    %17 = vector.load %arg6[%c0_12, %c0_13] : memref<1x128xf32, #tpu.memory_space<vmem>>, vector<1x128xf32>
    %18 = vector.broadcast %17 : vector<1x128xf32> to vector<16x128xf32>
    %19 = arith.mulf %16, %18 : vector<16x128xf32>
    %cst_14 = arith.constant dense<0.000000e+00> : vector<16xf32>
    %20 = vector.multi_reduction <add>, %19, %cst_14 [1] : vector<16x128xf32> to vector<16xf32>
    %21 = vector.shape_cast %20 : vector<16xf32> to vector<16x1xf32>
    %22 = arith.negf %21 : vector<16x1xf32>
    %23 = math.exp %22 : vector<16x1xf32>
    %cst_15 = arith.constant 1.000000e+00 : f32
    %24 = vector.broadcast %cst_15 : f32 to vector<16x1xf32>
    %25 = arith.addf %24, %23 : vector<16x1xf32>
    %26 = arith.divf %24, %25 : vector<16x1xf32>
    %c0_16 = arith.constant 0 : index
    %c0_17 = arith.constant 0 : index
    %27 = vector.load %arg7[%c0_16, %c0_17] : memref<16x1xf32, #tpu.memory_space<vmem>>, vector<16x1xf32>
    tpu.vector_store %arg7[%c0_16, %c0_17], %26 {strides = array<i32>} : memref<16x1xf32, #tpu.memory_space<vmem>>, vector<16x1xf32>,
    return
  }
  func.func @transform_0(%arg0: i32) -> (i32, i32) {
    %c0_i32 = arith.constant 0 : i32
    %c0_i32_0 = arith.constant 0 : i32
    return %arg0, %c0_i32 : i32, i32
  }
  func.func @transform_1(%arg0: i32) -> (i32, i32) {
    %c0_i32 = arith.constant 0 : i32
    %c0_i32_0 = arith.constant 0 : i32
    %c0_i32_1 = arith.constant 0 : i32
    return %c0_i32, %c0_i32_0 : i32, i32
  }
  func.func @transform_2(%arg0: i32) -> (i32, i32) {
    %c0_i32 = arith.constant 0 : i32
    %c0_i32_0 = arith.constant 0 : i32
    %c0_i32_1 = arith.constant 0 : i32
    return %c0_i32, %c0_i32_0 : i32, i32
  }
  func.func @transform_3(%arg0: i32) -> (i32, i32) {
    %c0_i32 = arith.constant 0 : i32
    %c0_i32_0 = arith.constant 0 : i32
    %c0_i32_1 = arith.constant 0 : i32
    return %c0_i32, %c0_i32_0 : i32, i32
  }
  func.func @transform_4(%arg0: i32) -> (i32, i32) {
    %c0_i32 = arith.constant 0 : i32
    %c0_i32_0 = arith.constant 0 : i32
    %c0_i32_1 = arith.constant 0 : i32
    return %c0_i32, %c0_i32_0 : i32, i32
  }
  func.func @transform_5(%arg0: i32) -> (i32, i32) {
    %c0_i32 = arith.constant 0 : i32
    %c0_i32_0 = arith.constant 0 : i32
    %c0_i32_1 = arith.constant 0 : i32
    return %c0_i32, %c0_i32_0 : i32, i32
  }
  func.func @transform_6(%arg0: i32) -> (i32, i32) {
    %c0_i32 = arith.constant 0 : i32
    %c0_i32_0 = arith.constant 0 : i32
    return %arg0, %c0_i32 : i32, i32
  }
}

</mosaic_0001>

<llo_original>
// kernel: tpu_custom_call.1
$region0: #{tpu_custom_call.1}
  #allocation0 [shape = 'u32[]', space=smem, size = 0x4, offset = 0x4, fixed_abs, tag = 'smem constant byte address 0x4 - core index']
  #allocation1 [shape = 'u32[144,128]{1,0:T(1,128)}', space=vmem, size = 0x12000, scoped, tag = 'internal scratch']
  %s0 = inlined_call_operand.hbm [shape: f32[16,768], index: 0, kind: input, shape index: {}]
  %s1 = inlined_call_operand.hbm [shape: bf16[768,384], index: 1, kind: input, shape index: {}]
  %s2 = inlined_call_operand.vmem [shape: f32[1,384], index: 2, kind: input, shape index: {}]
  %s3 = inlined_call_operand.hbm [shape: bf16[384,128], index: 3, kind: input, shape index: {}]
  %s4 = inlined_call_operand.vmem [shape: f32[1,128], index: 4, kind: input, shape index: {}]
  %s5 = inlined_call_operand.vmem [shape: f32[1,128], index: 5, kind: input, shape index: {}]
  %s6 = inlined_call_operand.vmem [shape: f32[16,1], index: 6, kind: output, shape index: {}]
  %s7 = sld [smem:[#allocation0]]
  $region46: #{tpu_custom_call.1} parent=0
    _
  %s9 = ssub.s32 1, %s7
  %s10 = scalar_select 0, %s9, %s7
  $region1: #{tpu_custom_call.1} parent=0
    #allocation2 [shape = 'u8[49152]{0}', space=vmem, size = 0xc000, scoped, tag = 'input window, operand 0, single buffered']
    #allocation3 [shape = 's32[1]{0}', space=sflag, size = 0x4, scoped, tag = 'scoped memory for tpu_custom_call.1']
    #allocation4 [shape = 'u8[589824]{0}', space=vmem, size = 0x90000, scoped, tag = 'input window, operand 1, single buffered']
    #allocation5 [shape = 's32[1]{0}', space=sflag, size = 0x4, scoped, tag = 'scoped memory for tpu_custom_call.1']
    #allocation6 [shape = 'u8[98304]{0}', space=vmem, size = 0x18000, scoped, tag = 'input window, operand 3, single buffered']
    %11 = vsyncpa [#allocation3], 0
    %12 = vsyncpa [#allocation5], 0
    // Predicated region
    $region2: #{tpu_custom_call.1} parent=1 // pred_check
      _
    $region3: #{tpu_custom_call.1} parent=1 // pred_check_branch
      %14 = sbr.rel (0) target = $region5
    $region4: #{tpu_custom_call.1} parent=1 // pred_region
      %s16 = ssub.s32 1536, 1536
      %17 = vsyncadd [#allocation3], %s16
      %s18 = sshll.u32 [#allocation2], 4
      %s19 = int_to_ptr.vmem [resolvable:$true] %s18
      %24 = dma.hbm_to_vmem [thread:$0]  %s0, 1536, %s19, [#allocation3], 768, 768, 48
    $region5: #{tpu_custom_call.1} parent=1 // pred_fallthru
      _
    // Predicated region
    $region6: #{tpu_custom_call.1} parent=1 // pred_check
      _
    $region7: #{tpu_custom_call.1} parent=1 // pred_check_branch
      %26 = sbr.rel (0) target = $region9
    $region8: #{tpu_custom_call.1} parent=1 // pred_region
      %s28 = ssub.s32 18432, 18432
      %29 = vsyncadd [#allocation5], %s28
      %s30 = sshll.u32 [#allocation4], 4
      %s31 = int_to_ptr.vmem [resolvable:$true] %s30
      %36 = dma.hbm_to_vmem [thread:$0]  %s1, 18432, %s31, [#allocation5], 192, 192, 12
    $region9: #{tpu_custom_call.1} parent=1 // pred_fallthru
      _
    // Predicated region
    $region10: #{tpu_custom_call.1} parent=1 // pred_check
      _
    $region11: #{tpu_custom_call.1} parent=1 // pred_check_branch
      %38 = sbr.rel (0) target = $region13
    $region12: #{tpu_custom_call.1} parent=1 // pred_region
      _
    $region13: #{tpu_custom_call.1} parent=1 // pred_fallthru
      _
    // Predicated region
    $region14: #{tpu_custom_call.1} parent=1 // pred_check
      _
    $region15: #{tpu_custom_call.1} parent=1 // pred_check_branch
      %40 = sbr.rel (0) target = $region17
    $region16: #{tpu_custom_call.1} parent=1 // pred_region
      %s42 = ssub.s32 3072, 3072
      %43 = vsyncadd [#allocation5], %s42
      %s44 = sshll.u32 [#allocation6], 4
      %s45 = int_to_ptr.vmem [resolvable:$true] %s44
      %50 = dma.hbm_to_vmem [thread:$0]  %s3, 3072, %s45, [#allocation5], 64, 64, 4
    $region17: #{tpu_custom_call.1} parent=1 // pred_fallthru
      _
    // Predicated region
    $region18: #{tpu_custom_call.1} parent=1 // pred_check
      _
    $region19: #{tpu_custom_call.1} parent=1 // pred_check_branch
      %52 = sbr.rel (0) target = $region21
    $region20: #{tpu_custom_call.1} parent=1 // pred_region
      _
    $region21: #{tpu_custom_call.1} parent=1 // pred_fallthru
      _
    // Predicated region
    $region22: #{tpu_custom_call.1} parent=1 // pred_check
      _
    $region23: #{tpu_custom_call.1} parent=1 // pred_check_branch
      %54 = sbr.rel (0) target = $region25
    $region24: #{tpu_custom_call.1} parent=1 // pred_region
      _
    $region25: #{tpu_custom_call.1} parent=1 // pred_fallthru
      _
    // Predicated region
    $region26: #{tpu_custom_call.1} parent=1 // pred_check
      _
    $region27: #{tpu_custom_call.1} parent=1 // pred_check_branch
      %56 = sbr.rel (0) target = $region29
    $region28: #{tpu_custom_call.1} parent=1 // pred_region
      %57 = dma.done [#allocation3], 1536
    $region29: #{tpu_custom_call.1} parent=1 // pred_fallthru
      _
    // Predicated region
    $region30: #{tpu_custom_call.1} parent=1 // pred_check
      _
    $region31: #{tpu_custom_call.1} parent=1 // pred_check_branch
      %59 = sbr.rel (0) target = $region33
    $region32: #{tpu_custom_call.1} parent=1 // pred_region
      %60 = dma.done [#allocation5], 18432
    $region33: #{tpu_custom_call.1} parent=1 // pred_fallthru
      _
    // Predicated region
    $region34: #{tpu_custom_call.1} parent=1 // pred_check
      _
    $region35: #{tpu_custom_call.1} parent=1 // pred_check_branch
      %62 = sbr.rel (0) target = $region37
    $region36: #{tpu_custom_call.1} parent=1 // pred_region
      %63 = dma.done [#allocation5], 3072
    $region37: #{tpu_custom_call.1} parent=1 // pred_fallthru
      _
    %v65 = vld [vmem:[#allocation2] sm:$0xff]
    %v66 = vld [vmem:[#allocation2 + $0x8] sm:$0xff]
    %v67 = vld [vmem:[#allocation2 + $0x10] sm:$0xff]
    %v68 = vld [vmem:[#allocation2 + $0x18] sm:$0xff]
    %v69 = vld [vmem:[#allocation2 + $0x20] sm:$0xff]
    %v70 = vld [vmem:[#allocation2 + $0x28] sm:$0xff]
    %v71 = vld [vmem:[#allocation2 + $0x30] sm:$0xff]
    %v72 = vld [vmem:[#allocation2 + $0x38] sm:$0xff]
    %v73 = vld [vmem:[#allocation2 + $0x40] sm:$0xff]
    %v74 = vld [vmem:[#allocation2 + $0x48] sm:$0xff]
    %v75 = vld [vmem:[#allocation2 + $0x50] sm:$0xff]
    %v76 = vld [vmem:[#allocation2 + $0x58] sm:$0xff]
    %v77 = vpack.c.bf16 %v71, %v65
    %v78 = vpack.c.bf16 %v72, %v66
    %v79 = vpack.c.bf16 %v73, %v67
    %v80 = vpack.c.bf16 %v74, %v68
    %v81 = vpack.c.bf16 %v75, %v69
    %v82 = vpack.c.bf16 %v76, %v70
    %v83 = vld [vmem:[#allocation4] sm:$0xff]
    %v84 = vld [vmem:[#allocation4 + $0x8] sm:$0xf]
    %v85 = vld [vmem:[#allocation4 + $0xc] sm:$0xff]
    %v86 = vld [vmem:[#allocation4 + $0x14] sm:$0xf]
    %v87 = vld [vmem:[#allocation4 + $0x18] sm:$0xff]
    %v88 = vld [vmem:[#allocation4 + $0x20] sm:$0xf]
    %v89 = vld [vmem:[#allocation4 + $0x24] sm:$0xff]
    %v90 = vld [vmem:[#allocation4 + $0x2c] sm:$0xf]
    %v91 = vld [vmem:[#allocation4 + $0x30] sm:$0xff]
    %v92 = vld [vmem:[#allocation4 + $0x38] sm:$0xf]
    %v93 = vld [vmem:[#allocation4 + $0x3c] sm:$0xff]
    %v94 = vld [vmem:[#allocation4 + $0x44] sm:$0xf]
    %v95 = vld [vmem:[#allocation4 + $0x48] sm:$0xff]
    %v96 = vld [vmem:[#allocation4 + $0x50] sm:$0xf]
    %v97 = vld [vmem:[#allocation4 + $0x54] sm:$0xff]
    %v98 = vld [vmem:[#allocation4 + $0x5c] sm:$0xf]
    %v99 = vld [vmem:[#allocation4 + $0x60] sm:$0xff]
    %v100 = vld [vmem:[#allocation4 + $0x68] sm:$0xf]
    %v101 = vld [vmem:[#allocation4 + $0x6c] sm:$0xff]
    %v102 = vld [vmem:[#allocation4 + $0x74] sm:$0xf]
    %v103 = vld [vmem:[#allocation4 + $0x78] sm:$0xff]
    %v104 = vld [vmem:[#allocation4 + $0x80] sm:$0xf]
    %v105 = vld [vmem:[#allocation4 + $0x84] sm:$0xff]
    %v106 = vld [vmem:[#allocation4 + $0x8c] sm:$0xf]
    %v107 = vld [vmem:[#allocation4 + $0x90] sm:$0xff]
    %v108 = vld [vmem:[#allocation4 + $0x98] sm:$0xf]
    %v109 = vld [vmem:[#allocation4 + $0x9c] sm:$0xff]
    %v110 = vld [vmem:[#allocation4 + $0xa4] sm:$0xf]
    %v111 = vld [vmem:[#allocation4 + $0xa8] sm:$0xff]
    %v112 = vld [vmem:[#allocation4 + $0xb0] sm:$0xf]
    %v113 = vld [vmem:[#allocation4 + $0xb4] sm:$0xff]
    %v114 = vld [vmem:[#allocation4 + $0xbc] sm:$0xf]
    %v115 = vld [vmem:[#allocation4 + $0xc0] sm:$0xff]
    %v116 = vld [vmem:[#allocation4 + $0xc8] sm:$0xf]
    %v117 = vld [vmem:[#allocation4 + $0xcc] sm:$0xff]
    %v118 = vld [vmem:[#allocation4 + $0xd4] sm:$0xf]
    %v119 = vld [vmem:[#allocation4 + $0xd8] sm:$0xff]
    %v120 = vld [vmem:[#allocation4 + $0xe0] sm:$0xf]
    %v121 = vld [vmem:[#allocation4 + $0xe4] sm:$0xff]
    %v122 = vld [vmem:[#allocation4 + $0xec] sm:$0xf]
    %v123 = vld [vmem:[#allocation4 + $0xf0] sm:$0xff]
    %v124 = vld [vmem:[#allocation4 + $0xf8] sm:$0xf]
    %v125 = vld [vmem:[#allocation4 + $0xfc] sm:$0xff]
    %v126 = vld [vmem:[#allocation4 + $0x104] sm:$0xf]
    %v127 = vld [vmem:[#allocation4 + $0x108] sm:$0xff]
    %v128 = vld [vmem:[#allocation4 + $0x110] sm:$0xf]
    %v129 = vld [vmem:[#allocation4 + $0x114] sm:$0xff]
    %v130 = vld [vmem:[#allocation4 + $0x11c] sm:$0xf]
    %v131 = vld [vmem:[#allocation4 + $0x120] sm:$0xff]
    %v132 = vld [vmem:[#allocation4 + $0x128] sm:$0xf]
    %v133 = vld [vmem:[#allocation4 + $0x12c] sm:$0xff]
    %v134 = vld [vmem:[#allocation4 + $0x134] sm:$0xf]
    %v135 = vld [vmem:[#allocation4 + $0x138] sm:$0xff]
    %v136 = vld [vmem:[#allocation4 + $0x140] sm:$0xf]
    %v137 = vld [vmem:[#allocation4 + $0x144] sm:$0xff]
    %v138 = vld [vmem:[#allocation4 + $0x14c] sm:$0xf]
    %v139 = vld [vmem:[#allocation4 + $0x150] sm:$0xff]
    %v140 = vld [vmem:[#allocation4 + $0x158] sm:$0xf]
    %v141 = vld [vmem:[#allocation4 + $0x15c] sm:$0xff]
    %v142 = vld [vmem:[#allocation4 + $0x164] sm:$0xf]
    %v143 = vld [vmem:[#allocation4 + $0x168] sm:$0xff]
    %v144 = vld [vmem:[#allocation4 + $0x170] sm:$0xf]
    %v145 = vld [vmem:[#allocation4 + $0x174] sm:$0xff]
    %v146 = vld [vmem:[#allocation4 + $0x17c] sm:$0xf]
    %v147 = vld [vmem:[#allocation4 + $0x180] sm:$0xff]
    %v148 = vld [vmem:[#allocation4 + $0x188] sm:$0xf]
    %v149 = vld [vmem:[#allocation4 + $0x18c] sm:$0xff]
    %v150 = vld [vmem:[#allocation4 + $0x194] sm:$0xf]
    %v151 = vld [vmem:[#allocation4 + $0x198] sm:$0xff]
    %v152 = vld [vmem:[#allocation4 + $0x1a0] sm:$0xf]
    %v153 = vld [vmem:[#allocation4 + $0x1a4] sm:$0xff]
    %v154 = vld [vmem:[#allocation4 + $0x1ac] sm:$0xf]
    %v155 = vld [vmem:[#allocation4 + $0x1b0] sm:$0xff]
    %v156 = vld [vmem:[#allocation4 + $0x1b8] sm:$0xf]
    %v157 = vld [vmem:[#allocation4 + $0x1bc] sm:$0xff]
    %v158 = vld [vmem:[#allocation4 + $0x1c4] sm:$0xf]
    %v159 = vld [vmem:[#allocation4 + $0x1c8] sm:$0xff]
    %v160 = vld [vmem:[#allocation4 + $0x1d0] sm:$0xf]
    %v161 = vld [vmem:[#allocation4 + $0x1d4] sm:$0xff]
    %v162 = vld [vmem:[#allocation4 + $0x1dc] sm:$0xf]
    %v163 = vld [vmem:[#allocation4 + $0x1e0] sm:$0xff]
    %v164 = vld [vmem:[#allocation4 + $0x1e8] sm:$0xf]
    %v165 = vld [vmem:[#allocation4 + $0x1ec] sm:$0xff]
    %v166 = vld [vmem:[#allocation4 + $0x1f4] sm:$0xf]
    %v167 = vld [vmem:[#allocation4 + $0x1f8] sm:$0xff]
    %v168 = vld [vmem:[#allocation4 + $0x200] sm:$0xf]
    %v169 = vld [vmem:[#allocation4 + $0x204] sm:$0xff]
    %v170 = vld [vmem:[#allocation4 + $0x20c] sm:$0xf]
    %v171 = vld [vmem:[#allocation4 + $0x210] sm:$0xff]
    %v172 = vld [vmem:[#allocation4 + $0x218] sm:$0xf]
    %v173 = vld [vmem:[#allocation4 + $0x21c] sm:$0xff]
    %v174 = vld [vmem:[#allocation4 + $0x224] sm:$0xf]
    %v175 = vld [vmem:[#allocation4 + $0x228] sm:$0xff]
    %v176 = vld [vmem:[#allocation4 + $0x230] sm:$0xf]
    %v177 = vld [vmem:[#allocation4 + $0x234] sm:$0xff]
    %v178 = vld [vmem:[#allocation4 + $0x23c] sm:$0xf]
    %v179 = vld [vmem:[#allocation4 + $0x240] sm:$0xff]
    %v180 = vld [vmem:[#allocation4 + $0x248] sm:$0xf]
    %v181 = vld [vmem:[#allocation4 + $0x24c] sm:$0xff]
    %v182 = vld [vmem:[#allocation4 + $0x254] sm:$0xf]
    %v183 = vld [vmem:[#allocation4 + $0x258] sm:$0xff]
    %v184 = vld [vmem:[#allocation4 + $0x260] sm:$0xf]
    %v185 = vld [vmem:[#allocation4 + $0x264] sm:$0xff]
    %v186 = vld [vmem:[#allocation4 + $0x26c] sm:$0xf]
    %v187 = vld [vmem:[#allocation4 + $0x270] sm:$0xff]
    %v188 = vld [vmem:[#allocation4 + $0x278] sm:$0xf]
    %v189 = vld [vmem:[#allocation4 + $0x27c] sm:$0xff]
    %v190 = vld [vmem:[#allocation4 + $0x284] sm:$0xf]
    %v191 = vld [vmem:[#allocation4 + $0x288] sm:$0xff]
    %v192 = vld [vmem:[#allocation4 + $0x290] sm:$0xf]
    %v193 = vld [vmem:[#allocation4 + $0x294] sm:$0xff]
    %v194 = vld [vmem:[#allocation4 + $0x29c] sm:$0xf]
    %v195 = vld [vmem:[#allocation4 + $0x2a0] sm:$0xff]
    %v196 = vld [vmem:[#allocation4 + $0x2a8] sm:$0xf]
    %v197 = vld [vmem:[#allocation4 + $0x2ac] sm:$0xff]
    %v198 = vld [vmem:[#allocation4 + $0x2b4] sm:$0xf]
    %v199 = vld [vmem:[#allocation4 + $0x2b8] sm:$0xff]
    %v200 = vld [vmem:[#allocation4 + $0x2c0] sm:$0xf]
    %v201 = vld [vmem:[#allocation4 + $0x2c4] sm:$0xff]
    %v202 = vld [vmem:[#allocation4 + $0x2cc] sm:$0xf]
    %v203 = vld [vmem:[#allocation4 + $0x2d0] sm:$0xff]
    %v204 = vld [vmem:[#allocation4 + $0x2d8] sm:$0xf]
    %v205 = vld [vmem:[#allocation4 + $0x2dc] sm:$0xff]
    %v206 = vld [vmem:[#allocation4 + $0x2e4] sm:$0xf]
    %v207 = vld [vmem:[#allocation4 + $0x2e8] sm:$0xff]
    %v208 = vld [vmem:[#allocation4 + $0x2f0] sm:$0xf]
    %v209 = vld [vmem:[#allocation4 + $0x2f4] sm:$0xff]
    %v210 = vld [vmem:[#allocation4 + $0x2fc] sm:$0xf]
    %v211 = vld [vmem:[#allocation4 + $0x300] sm:$0xff]
    %v212 = vld [vmem:[#allocation4 + $0x308] sm:$0xf]
    %v213 = vld [vmem:[#allocation4 + $0x30c] sm:$0xff]
    %v214 = vld [vmem:[#allocation4 + $0x314] sm:$0xf]
    %v215 = vld [vmem:[#allocation4 + $0x318] sm:$0xff]
    %v216 = vld [vmem:[#allocation4 + $0x320] sm:$0xf]
    %v217 = vld [vmem:[#allocation4 + $0x324] sm:$0xff]
    %v218 = vld [vmem:[#allocation4 + $0x32c] sm:$0xf]
    %v219 = vld [vmem:[#allocation4 + $0x330] sm:$0xff]
    %v220 = vld [vmem:[#allocation4 + $0x338] sm:$0xf]
    %v221 = vld [vmem:[#allocation4 + $0x33c] sm:$0xff]
    %v222 = vld [vmem:[#allocation4 + $0x344] sm:$0xf]
    %v223 = vld [vmem:[#allocation4 + $0x348] sm:$0xff]
    %v224 = vld [vmem:[#allocation4 + $0x350] sm:$0xf]
    %v225 = vld [vmem:[#allocation4 + $0x354] sm:$0xff]
    %v226 = vld [vmem:[#allocation4 + $0x35c] sm:$0xf]
    %v227 = vld [vmem:[#allocation4 + $0x360] sm:$0xff]
    %v228 = vld [vmem:[#allocation4 + $0x368] sm:$0xf]
    %v229 = vld [vmem:[#allocation4 + $0x36c] sm:$0xff]
    %v230 = vld [vmem:[#allocation4 + $0x374] sm:$0xf]
    %v231 = vld [vmem:[#allocation4 + $0x378] sm:$0xff]
    %v232 = vld [vmem:[#allocation4 + $0x380] sm:$0xf]
    %v233 = vld [vmem:[#allocation4 + $0x384] sm:$0xff]
    %v234 = vld [vmem:[#allocation4 + $0x38c] sm:$0xf]
    %v235 = vld [vmem:[#allocation4 + $0x390] sm:$0xff]
    %v236 = vld [vmem:[#allocation4 + $0x398] sm:$0xf]
    %v237 = vld [vmem:[#allocation4 + $0x39c] sm:$0xff]
    %v238 = vld [vmem:[#allocation4 + $0x3a4] sm:$0xf]
    %v239 = vld [vmem:[#allocation4 + $0x3a8] sm:$0xff]
    %v240 = vld [vmem:[#allocation4 + $0x3b0] sm:$0xf]
    %v241 = vld [vmem:[#allocation4 + $0x3b4] sm:$0xff]
    %v242 = vld [vmem:[#allocation4 + $0x3bc] sm:$0xf]
    %v243 = vld [vmem:[#allocation4 + $0x3c0] sm:$0xff]
    %v244 = vld [vmem:[#allocation4 + $0x3c8] sm:$0xf]
    %v245 = vld [vmem:[#allocation4 + $0x3cc] sm:$0xff]
    %v246 = vld [vmem:[#allocation4 + $0x3d4] sm:$0xf]
    %v247 = vld [vmem:[#allocation4 + $0x3d8] sm:$0xff]
    %v248 = vld [vmem:[#allocation4 + $0x3e0] sm:$0xf]
    %v249 = vld [vmem:[#allocation4 + $0x3e4] sm:$0xff]
    %v250 = vld [vmem:[#allocation4 + $0x3ec] sm:$0xf]
    %v251 = vld [vmem:[#allocation4 + $0x3f0] sm:$0xff]
    %v252 = vld [vmem:[#allocation4 + $0x3f8] sm:$0xf]
    %v253 = vld [vmem:[#allocation4 + $0x3fc] sm:$0xff]
    %v254 = vld [vmem:[#allocation4 + $0x404] sm:$0xf]
    %v255 = vld [vmem:[#allocation4 + $0x408] sm:$0xff]
    %v256 = vld [vmem:[#allocation4 + $0x410] sm:$0xf]
    %v257 = vld [vmem:[#allocation4 + $0x414] sm:$0xff]
    %v258 = vld [vmem:[#allocation4 + $0x41c] sm:$0xf]
    %v259 = vld [vmem:[#allocation4 + $0x420] sm:$0xff]
    %v260 = vld [vmem:[#allocation4 + $0x428] sm:$0xf]
    %v261 = vld [vmem:[#allocation4 + $0x42c] sm:$0xff]
    %v262 = vld [vmem:[#allocation4 + $0x434] sm:$0xf]
    %v263 = vld [vmem:[#allocation4 + $0x438] sm:$0xff]
    %v264 = vld [vmem:[#allocation4 + $0x440] sm:$0xf]
    %v265 = vld [vmem:[#allocation4 + $0x444] sm:$0xff]
    %v266 = vld [vmem:[#allocation4 + $0x44c] sm:$0xf]
    %v267 = vld [vmem:[#allocation4 + $0x450] sm:$0xff]
    %v268 = vld [vmem:[#allocation4 + $0x458] sm:$0xf]
    %v269 = vld [vmem:[#allocation4 + $0x45c] sm:$0xff]
    %v270 = vld [vmem:[#allocation4 + $0x464] sm:$0xf]
    %v271 = vld [vmem:[#allocation4 + $0x468] sm:$0xff]
    %v272 = vld [vmem:[#allocation4 + $0x470] sm:$0xf]
    %v273 = vld [vmem:[#allocation4 + $0x474] sm:$0xff]
    %v274 = vld [vmem:[#allocation4 + $0x47c] sm:$0xf]
    %v275 = vld [vmem:[%s2] sm:$0x7]
    %v277 = vlaneseq
    %v278 = vshrl.u32 %v277, 7
    %v279 = vsub.s32 0, %v278
    %v280 = vrot.slane %v275, %v279
    %v281 = vlaneseq
    %v282 = vshrl.u32 %v281, 7
    %v283 = vsub.s32 1, %v282
    %v284 = vrot.slane %v275, %v283
    %v285 = vlaneseq
    %v286 = vshrl.u32 %v285, 7
    %v287 = vsub.s32 2, %v286
    %v288 = vrot.slane %v275, %v287
    %v484 = vunpack.c.l.b16 %v83
    %v485 = vunpack.c.h.b16 %v83
    %v486 = vunpack.c.l.b16 %v84
    %v487 = vunpack.c.l.b16 %v85
    %v488 = vunpack.c.h.b16 %v85
    %v489 = vunpack.c.l.b16 %v86
    %v490 = vunpack.c.l.b16 %v87
    %v491 = vunpack.c.h.b16 %v87
    %v492 = vunpack.c.l.b16 %v88
    %v493 = vunpack.c.l.b16 %v89
    %v494 = vunpack.c.h.b16 %v89
    %v495 = vunpack.c.l.b16 %v90
    %v496 = vunpack.c.l.b16 %v91
    %v497 = vunpack.c.h.b16 %v91
    %v498 = vunpack.c.l.b16 %v92
    %v499 = vunpack.c.l.b16 %v93
    %v500 = vunpack.c.h.b16 %v93
    %v501 = vunpack.c.l.b16 %v94
    %v502 = vunpack.c.l.b16 %v95
    %v503 = vunpack.c.h.b16 %v95
    %v504 = vunpack.c.l.b16 %v96
    %v505 = vunpack.c.l.b16 %v97
    %v506 = vunpack.c.h.b16 %v97
    %v507 = vunpack.c.l.b16 %v98
    %v508 = vunpack.c.l.b16 %v99
    %v509 = vunpack.c.h.b16 %v99
    %v510 = vunpack.c.l.b16 %v100
    %v511 = vunpack.c.l.b16 %v101
    %v512 = vunpack.c.h.b16 %v101
    %v513 = vunpack.c.l.b16 %v102
    %v514 = vunpack.c.l.b16 %v103
    %v515 = vunpack.c.h.b16 %v103
    %v516 = vunpack.c.l.b16 %v104
    %v517 = vunpack.c.l.b16 %v105
    %v518 = vunpack.c.h.b16 %v105
    %v519 = vunpack.c.l.b16 %v106
    %v520 = vunpack.c.l.b16 %v107
    %v521 = vunpack.c.h.b16 %v107
    %v522 = vunpack.c.l.b16 %v108
    %v523 = vunpack.c.l.b16 %v109
    %v524 = vunpack.c.h.b16 %v109
    %v525 = vunpack.c.l.b16 %v110
    %v526 = vunpack.c.l.b16 %v111
    %v527 = vunpack.c.h.b16 %v111
    %v528 = vunpack.c.l.b16 %v112
    %v529 = vunpack.c.l.b16 %v113
    %v530 = vunpack.c.h.b16 %v113
    %v531 = vunpack.c.l.b16 %v114
    %v532 = vunpack.c.l.b16 %v115
    %v533 = vunpack.c.h.b16 %v115
    %v534 = vunpack.c.l.b16 %v116
    %v535 = vunpack.c.l.b16 %v117
    %v536 = vunpack.c.h.b16 %v117
    %v537 = vunpack.c.l.b16 %v118
    %v538 = vunpack.c.l.b16 %v119
    %v539 = vunpack.c.h.b16 %v119
    %v540 = vunpack.c.l.b16 %v120
    %v541 = vunpack.c.l.b16 %v121
    %v542 = vunpack.c.h.b16 %v121
    %v543 = vunpack.c.l.b16 %v122
    %v544 = vunpack.c.l.b16 %v123
    %v545 = vunpack.c.h.b16 %v123
    %v546 = vunpack.c.l.b16 %v124
    %v547 = vunpack.c.l.b16 %v125
    %v548 = vunpack.c.h.b16 %v125
    %v549 = vunpack.c.l.b16 %v126
    %v550 = vunpack.c.l.b16 %v127
    %v551 = vunpack.c.h.b16 %v127
    %v552 = vunpack.c.l.b16 %v128
    %v553 = vunpack.c.l.b16 %v129
    %v554 = vunpack.c.h.b16 %v129
    %v555 = vunpack.c.l.b16 %v130
    %v556 = vunpack.c.l.b16 %v131
    %v557 = vunpack.c.h.b16 %v131
    %v558 = vunpack.c.l.b16 %v132
    %v559 = vunpack.c.l.b16 %v133
    %v560 = vunpack.c.h.b16 %v133
    %v561 = vunpack.c.l.b16 %v134
    %v562 = vunpack.c.l.b16 %v135
    %v563 = vunpack.c.h.b16 %v135
    %v564 = vunpack.c.l.b16 %v136
    %v565 = vunpack.c.l.b16 %v137
    %v566 = vunpack.c.h.b16 %v137
    %v567 = vunpack.c.l.b16 %v138
    %v568 = vunpack.c.l.b16 %v139
    %v569 = vunpack.c.h.b16 %v139
    %v570 = vunpack.c.l.b16 %v140
    %v571 = vunpack.c.l.b16 %v141
    %v572 = vunpack.c.h.b16 %v141
    %v573 = vunpack.c.l.b16 %v142
    %v574 = vunpack.c.l.b16 %v143
    %v575 = vunpack.c.h.b16 %v143
    %v576 = vunpack.c.l.b16 %v144
    %v577 = vunpack.c.l.b16 %v145
    %v578 = vunpack.c.h.b16 %v145
    %v579 = vunpack.c.l.b16 %v146
    %v580 = vunpack.c.l.b16 %v147
    %v581 = vunpack.c.h.b16 %v147
    %v582 = vunpack.c.l.b16 %v148
    %v583 = vunpack.c.l.b16 %v149
    %v584 = vunpack.c.h.b16 %v149
    %v585 = vunpack.c.l.b16 %v150
    %v586 = vunpack.c.l.b16 %v151
    %v587 = vunpack.c.h.b16 %v151
    %v588 = vunpack.c.l.b16 %v152
    %v589 = vunpack.c.l.b16 %v153
    %v590 = vunpack.c.h.b16 %v153
    %v591 = vunpack.c.l.b16 %v154
    %v592 = vunpack.c.l.b16 %v155
    %v593 = vunpack.c.h.b16 %v155
    %v594 = vunpack.c.l.b16 %v156
    %v595 = vunpack.c.l.b16 %v157
    %v596 = vunpack.c.h.b16 %v157
    %v597 = vunpack.c.l.b16 %v158
    %v598 = vunpack.c.l.b16 %v159
    %v599 = vunpack.c.h.b16 %v159
    %v600 = vunpack.c.l.b16 %v160
    %v601 = vunpack.c.l.b16 %v161
    %v602 = vunpack.c.h.b16 %v161
    %v603 = vunpack.c.l.b16 %v162
    %v604 = vunpack.c.l.b16 %v163
    %v605 = vunpack.c.h.b16 %v163
    %v606 = vunpack.c.l.b16 %v164
    %v607 = vunpack.c.l.b16 %v165
    %v608 = vunpack.c.h.b16 %v165
    %v609 = vunpack.c.l.b16 %v166
    %v610 = vunpack.c.l.b16 %v167
    %v611 = vunpack.c.h.b16 %v167
    %v612 = vunpack.c.l.b16 %v168
    %v613 = vunpack.c.l.b16 %v169
    %v614 = vunpack.c.h.b16 %v169
    %v615 = vunpack.c.l.b16 %v170
    %v616 = vunpack.c.l.b16 %v171
    %v617 = vunpack.c.h.b16 %v171
    %v618 = vunpack.c.l.b16 %v172
    %v619 = vunpack.c.l.b16 %v173
    %v620 = vunpack.c.h.b16 %v173
    %v621 = vunpack.c.l.b16 %v174
    %v622 = vunpack.c.l.b16 %v175
    %v623 = vunpack.c.h.b16 %v175
    %v624 = vunpack.c.l.b16 %v176
    %v625 = vunpack.c.l.b16 %v177
    %v626 = vunpack.c.h.b16 %v177
    %v627 = vunpack.c.l.b16 %v178
    %v628 = vunpack.c.l.b16 %v179
    %v629 = vunpack.c.h.b16 %v179
    %v630 = vunpack.c.l.b16 %v180
    %v631 = vunpack.c.l.b16 %v181
    %v632 = vunpack.c.h.b16 %v181
    %v633 = vunpack.c.l.b16 %v182
    %v634 = vunpack.c.l.b16 %v183
    %v635 = vunpack.c.h.b16 %v183
    %v636 = vunpack.c.l.b16 %v184
    %v637 = vunpack.c.l.b16 %v185
    %v638 = vunpack.c.h.b16 %v185
    %v639 = vunpack.c.l.b16 %v186
    %v640 = vunpack.c.l.b16 %v187
    %v641 = vunpack.c.h.b16 %v187
    %v642 = vunpack.c.l.b16 %v188
    %v643 = vunpack.c.l.b16 %v189
    %v644 = vunpack.c.h.b16 %v189
    %v645 = vunpack.c.l.b16 %v190
    %v646 = vunpack.c.l.b16 %v191
    %v647 = vunpack.c.h.b16 %v191
    %v648 = vunpack.c.l.b16 %v192
    %v649 = vunpack.c.l.b16 %v193
    %v650 = vunpack.c.h.b16 %v193
    %v651 = vunpack.c.l.b16 %v194
    %v652 = vunpack.c.l.b16 %v195
    %v653 = vunpack.c.h.b16 %v195
    %v654 = vunpack.c.l.b16 %v196
    %v655 = vunpack.c.l.b16 %v197
    %v656 = vunpack.c.h.b16 %v197
    %v657 = vunpack.c.l.b16 %v198
    %v658 = vunpack.c.l.b16 %v199
    %v659 = vunpack.c.h.b16 %v199
    %v660 = vunpack.c.l.b16 %v200
    %v661 = vunpack.c.l.b16 %v201
    %v662 = vunpack.c.h.b16 %v201
    %v663 = vunpack.c.l.b16 %v202
    %v664 = vunpack.c.l.b16 %v203
    %v665 = vunpack.c.h.b16 %v203
    %v666 = vunpack.c.l.b16 %v204
    %v667 = vunpack.c.l.b16 %v205
    %v668 = vunpack.c.h.b16 %v205
    %v669 = vunpack.c.l.b16 %v206
    %v670 = vunpack.c.l.b16 %v207
    %v671 = vunpack.c.h.b16 %v207
    %v672 = vunpack.c.l.b16 %v208
    %v673 = vunpack.c.l.b16 %v209
    %v674 = vunpack.c.h.b16 %v209
    %v675 = vunpack.c.l.b16 %v210
    %v676 = vunpack.c.l.b16 %v211
    %v677 = vunpack.c.h.b16 %v211
    %v678 = vunpack.c.l.b16 %v212
    %v679 = vunpack.c.l.b16 %v213
    %v680 = vunpack.c.h.b16 %v213
    %v681 = vunpack.c.l.b16 %v214
    %v682 = vunpack.c.l.b16 %v215
    %v683 = vunpack.c.h.b16 %v215
    %v684 = vunpack.c.l.b16 %v216
    %v685 = vunpack.c.l.b16 %v217
    %v686 = vunpack.c.h.b16 %v217
    %v687 = vunpack.c.l.b16 %v218
    %v688 = vunpack.c.l.b16 %v219
    %v689 = vunpack.c.h.b16 %v219
    %v690 = vunpack.c.l.b16 %v220
    %v691 = vunpack.c.l.b16 %v221
    %v692 = vunpack.c.h.b16 %v221
    %v693 = vunpack.c.l.b16 %v222
    %v694 = vunpack.c.l.b16 %v223
    %v695 = vunpack.c.h.b16 %v223
    %v696 = vunpack.c.l.b16 %v224
    %v697 = vunpack.c.l.b16 %v225
    %v698 = vunpack.c.h.b16 %v225
    %v699 = vunpack.c.l.b16 %v226
    %v700 = vunpack.c.l.b16 %v227
    %v701 = vunpack.c.h.b16 %v227
    %v702 = vunpack.c.l.b16 %v228
    %v703 = vunpack.c.l.b16 %v229
    %v704 = vunpack.c.h.b16 %v229
    %v705 = vunpack.c.l.b16 %v230
    %v706 = vunpack.c.l.b16 %v231
    %v707 = vunpack.c.h.b16 %v231
    %v708 = vunpack.c.l.b16 %v232
    %v709 = vunpack.c.l.b16 %v233
    %v710 = vunpack.c.h.b16 %v233
    %v711 = vunpack.c.l.b16 %v234
    %v712 = vunpack.c.l.b16 %v235
    %v713 = vunpack.c.h.b16 %v235
    %v714 = vunpack.c.l.b16 %v236
    %v715 = vunpack.c.l.b16 %v237
    %v716 = vunpack.c.h.b16 %v237
    %v717 = vunpack.c.l.b16 %v238
    %v718 = vunpack.c.l.b16 %v239
    %v719 = vunpack.c.h.b16 %v239
    %v720 = vunpack.c.l.b16 %v240
    %v721 = vunpack.c.l.b16 %v241
    %v722 = vunpack.c.h.b16 %v241
    %v723 = vunpack.c.l.b16 %v242
    %v724 = vunpack.c.l.b16 %v243
    %v725 = vunpack.c.h.b16 %v243
    %v726 = vunpack.c.l.b16 %v244
    %v727 = vunpack.c.l.b16 %v245
    %v728 = vunpack.c.h.b16 %v245
    %v729 = vunpack.c.l.b16 %v246
    %v730 = vunpack.c.l.b16 %v247
    %v731 = vunpack.c.h.b16 %v247
    %v732 = vunpack.c.l.b16 %v248
    %v733 = vunpack.c.l.b16 %v249
    %v734 = vunpack.c.h.b16 %v249
    %v735 = vunpack.c.l.b16 %v250
    %v736 = vunpack.c.l.b16 %v251
    %v737 = vunpack.c.h.b16 %v251
    %v738 = vunpack.c.l.b16 %v252
    %v739 = vunpack.c.l.b16 %v253
    %v740 = vunpack.c.h.b16 %v253
    %v741 = vunpack.c.l.b16 %v254
    %v742 = vunpack.c.l.b16 %v255
    %v743 = vunpack.c.h.b16 %v255
    %v744 = vunpack.c.l.b16 %v256
    %v745 = vunpack.c.l.b16 %v257
    %v746 = vunpack.c.h.b16 %v257
    %v747 = vunpack.c.l.b16 %v258
    %v748 = vunpack.c.l.b16 %v259
    %v749 = vunpack.c.h.b16 %v259
    %v750 = vunpack.c.l.b16 %v260
    %v751 = vunpack.c.l.b16 %v261
    %v752 = vunpack.c.h.b16 %v261
    %v753 = vunpack.c.l.b16 %v262
    %v754 = vunpack.c.l.b16 %v263
    %v755 = vunpack.c.h.b16 %v263
    %v756 = vunpack.c.l.b16 %v264
    %v757 = vunpack.c.l.b16 %v265
    %v758 = vunpack.c.h.b16 %v265
    %v759 = vunpack.c.l.b16 %v266
    %v760 = vunpack.c.l.b16 %v267
    %v761 = vunpack.c.h.b16 %v267
    %v762 = vunpack.c.l.b16 %v268
    %v763 = vunpack.c.l.b16 %v269
    %v764 = vunpack.c.h.b16 %v269
    %v765 = vunpack.c.l.b16 %v270
    %v766 = vunpack.c.l.b16 %v271
    %v767 = vunpack.c.h.b16 %v271
    %v768 = vunpack.c.l.b16 %v272
    %v769 = vunpack.c.l.b16 %v273
    %v770 = vunpack.c.h.b16 %v273
    %v771 = vunpack.c.l.b16 %v274
    %v772 = vpack.c.b16 %v487, %v484
    %v773 = vpack.c.b16 %v488, %v485
    %v774 = vpack.c.b16 %v489, %v486
    %v775 = vpack.c.b16 %v493, %v490
    %v776 = vpack.c.b16 %v494, %v491
    %v777 = vpack.c.b16 %v495, %v492
    %v778 = vpack.c.b16 %v499, %v496
    %v779 = vpack.c.b16 %v500, %v497
    %v780 = vpack.c.b16 %v501, %v498
    %v781 = vpack.c.b16 %v505, %v502
    %v782 = vpack.c.b16 %v506, %v503
    %v783 = vpack.c.b16 %v507, %v504
    %v784 = vpack.c.b16 %v511, %v508
    %v785 = vpack.c.b16 %v512, %v509
    %v786 = vpack.c.b16 %v513, %v510
    %v787 = vpack.c.b16 %v517, %v514
    %v788 = vpack.c.b16 %v518, %v515
    %v789 = vpack.c.b16 %v519, %v516
    %v790 = vpack.c.b16 %v523, %v520
    %v791 = vpack.c.b16 %v524, %v521
    %v792 = vpack.c.b16 %v525, %v522
    %v793 = vpack.c.b16 %v529, %v526
    %v794 = vpack.c.b16 %v530, %v527
    %v795 = vpack.c.b16 %v531, %v528
    %v796 = vpack.c.b16 %v535, %v532
    %v797 = vpack.c.b16 %v536, %v533
    %v798 = vpack.c.b16 %v537, %v534
    %v799 = vpack.c.b16 %v541, %v538
    %v800 = vpack.c.b16 %v542, %v539
    %v801 = vpack.c.b16 %v543, %v540
    %v802 = vpack.c.b16 %v547, %v544
    %v803 = vpack.c.b16 %v548, %v545
    %v804 = vpack.c.b16 %v549, %v546
    %v805 = vpack.c.b16 %v553, %v550
    %v806 = vpack.c.b16 %v554, %v551
    %v807 = vpack.c.b16 %v555, %v552
    %v808 = vpack.c.b16 %v559, %v556
    %v809 = vpack.c.b16 %v560, %v557
    %v810 = vpack.c.b16 %v561, %v558
    %v811 = vpack.c.b16 %v565, %v562
    %v812 = vpack.c.b16 %v566, %v563
    %v813 = vpack.c.b16 %v567, %v564
    %v814 = vpack.c.b16 %v571, %v568
    %v815 = vpack.c.b16 %v572, %v569
    %v816 = vpack.c.b16 %v573, %v570
    %v817 = vpack.c.b16 %v577, %v574
    %v818 = vpack.c.b16 %v578, %v575
    %v819 = vpack.c.b16 %v579, %v576
    %v820 = vpack.c.b16 %v583, %v580
    %v821 = vpack.c.b16 %v584, %v581
    %v822 = vpack.c.b16 %v585, %v582
    %v823 = vpack.c.b16 %v589, %v586
    %v824 = vpack.c.b16 %v590, %v587
    %v825 = vpack.c.b16 %v591, %v588
    %v826 = vpack.c.b16 %v595, %v592
    %v827 = vpack.c.b16 %v596, %v593
    %v828 = vpack.c.b16 %v597, %v594
    %v829 = vpack.c.b16 %v601, %v598
    %v830 = vpack.c.b16 %v602, %v599
    %v831 = vpack.c.b16 %v603, %v600
    %v832 = vpack.c.b16 %v607, %v604
    %v833 = vpack.c.b16 %v608, %v605
    %v834 = vpack.c.b16 %v609, %v606
    %v835 = vpack.c.b16 %v613, %v610
    %v836 = vpack.c.b16 %v614, %v611
    %v837 = vpack.c.b16 %v615, %v612
    %v838 = vpack.c.b16 %v619, %v616
    %v839 = vpack.c.b16 %v620, %v617
    %v840 = vpack.c.b16 %v621, %v618
    %v841 = vpack.c.b16 %v625, %v622
    %v842 = vpack.c.b16 %v626, %v623
    %v843 = vpack.c.b16 %v627, %v624
    %v844 = vpack.c.b16 %v631, %v628
    %v845 = vpack.c.b16 %v632, %v629
    %v846 = vpack.c.b16 %v633, %v630
    %v847 = vpack.c.b16 %v637, %v634
    %v848 = vpack.c.b16 %v638, %v635
    %v849 = vpack.c.b16 %v639, %v636
    %v850 = vpack.c.b16 %v643, %v640
    %v851 = vpack.c.b16 %v644, %v641
    %v852 = vpack.c.b16 %v645, %v642
    %v853 = vpack.c.b16 %v649, %v646
    %v854 = vpack.c.b16 %v650, %v647
    %v855 = vpack.c.b16 %v651, %v648
    %v856 = vpack.c.b16 %v655, %v652
    %v857 = vpack.c.b16 %v656, %v653
    %v858 = vpack.c.b16 %v657, %v654
    %v859 = vpack.c.b16 %v661, %v658
    %v860 = vpack.c.b16 %v662, %v659
    %v861 = vpack.c.b16 %v663, %v660
    %v862 = vpack.c.b16 %v667, %v664
    %v863 = vpack.c.b16 %v668, %v665
    %v864 = vpack.c.b16 %v669, %v666
    %v865 = vpack.c.b16 %v673, %v670
    %v866 = vpack.c.b16 %v674, %v671
    %v867 = vpack.c.b16 %v675, %v672
    %v868 = vpack.c.b16 %v679, %v676
    %v869 = vpack.c.b16 %v680, %v677
    %v870 = vpack.c.b16 %v681, %v678
    %v871 = vpack.c.b16 %v685, %v682
    %v872 = vpack.c.b16 %v686, %v683
    %v873 = vpack.c.b16 %v687, %v684
    %v874 = vpack.c.b16 %v691, %v688
    %v875 = vpack.c.b16 %v692, %v689
    %v876 = vpack.c.b16 %v693, %v690
    %v877 = vpack.c.b16 %v697, %v694
    %v878 = vpack.c.b16 %v698, %v695
    %v879 = vpack.c.b16 %v699, %v696
    %v880 = vpack.c.b16 %v703, %v700
    %v881 = vpack.c.b16 %v704, %v701
    %v882 = vpack.c.b16 %v705, %v702
    %v883 = vpack.c.b16 %v709, %v706
    %v884 = vpack.c.b16 %v710, %v707
    %v885 = vpack.c.b16 %v711, %v708
    %v886 = vpack.c.b16 %v715, %v712
    %v887 = vpack.c.b16 %v716, %v713
    %v888 = vpack.c.b16 %v717, %v714
    %v889 = vpack.c.b16 %v721, %v718
    %v890 = vpack.c.b16 %v722, %v719
    %v891 = vpack.c.b16 %v723, %v720
    %v892 = vpack.c.b16 %v727, %v724
    %v893 = vpack.c.b16 %v728, %v725
    %v894 = vpack.c.b16 %v729, %v726
    %v895 = vpack.c.b16 %v733, %v730
    %v896 = vpack.c.b16 %v734, %v731
    %v897 = vpack.c.b16 %v735, %v732
    %v898 = vpack.c.b16 %v739, %v736
    %v899 = vpack.c.b16 %v740, %v737
    %v900 = vpack.c.b16 %v741, %v738
    %v901 = vpack.c.b16 %v745, %v742
    %v902 = vpack.c.b16 %v746, %v743
    %v903 = vpack.c.b16 %v747, %v744
    %v904 = vpack.c.b16 %v751, %v748
    %v905 = vpack.c.b16 %v752, %v749
    %v906 = vpack.c.b16 %v753, %v750
    %v907 = vpack.c.b16 %v757, %v754
    %v908 = vpack.c.b16 %v758, %v755
    %v909 = vpack.c.b16 %v759, %v756
    %v910 = vpack.c.b16 %v763, %v760
    %v911 = vpack.c.b16 %v764, %v761
    %v912 = vpack.c.b16 %v765, %v762
    %v913 = vpack.c.b16 %v769, %v766
    %v914 = vpack.c.b16 %v770, %v767
    %v915 = vpack.c.b16 %v771, %v768
    %1060 = vmatprep.subr.bf16.mxu0 %v773
    %1061 = vmatpush1.bf16.msra.mxu0 %v772
    %1062 = vmatprep.subr.bf16.mxu0 %v776
    %1063 = vmatpush1.bf16.msra.mxu0 %v775
    %1064 = vmatprep.subr.bf16.mxu0 %v779
    %1065 = vmatpush1.bf16.msra.mxu0 %v778
    %1066 = vmatprep.subr.bf16.mxu0 %v782
    %1067 = vmatpush1.bf16.msra.mxu0 %v781
    %1068 = vmatprep.subr.bf16.mxu0 %v785
    %1069 = vmatpush1.bf16.msra.mxu0 %v784
    %1070 = vmatprep.subr.bf16.mxu0 %v788
    %1071 = vmatpush1.bf16.msra.mxu0 %v787
    %1072 = vmatprep.subr.bf16.mxu0 %v791
    %1073 = vmatpush1.bf16.msra.mxu0 %v790
    %1074 = vmatprep.subr.bf16.mxu0 %v794
    %1075 = vmatpush1.bf16.msra.mxu0 %v793
    %1076 = vmatprep.subr.bf16.mxu0 %v797
    %1077 = vmatpush1.bf16.msra.mxu0 %v796
    %1078 = vmatprep.subr.bf16.mxu0 %v800
    %1079 = vmatpush1.bf16.msra.mxu0 %v799
    %1080 = vmatprep.subr.bf16.mxu0 %v803
    %1081 = vmatpush1.bf16.msra.mxu0 %v802
    %1082 = vmatprep.subr.bf16.mxu0 %v806
    %1083 = vmatpush1.bf16.msra.mxu0 %v805
    %1084 = vmatprep.subr.bf16.mxu0 %v809
    %1085 = vmatpush1.bf16.msra.mxu0 %v808
    %1086 = vmatprep.subr.bf16.mxu0 %v812
    %1087 = vmatpush1.bf16.msra.mxu0 %v811
    %1088 = vmatprep.subr.bf16.mxu0 %v815
    %1089 = vmatpush1.bf16.msra.mxu0 %v814
    %1090 = vmatprep.subr.bf16.mxu0 %v818
    %1091 = vmatpush1.bf16.msra.mxu0 %v817
    %1092 = vmatprep.mubr.bf16.mxu0 %v78
    %1093 = vmatmul.mubr.bf16.gmra.mrb[0].mxu0 %v77
    %v1094 = vpop.f32.mrb[0].mxu0
    %v1095 = vadd.f32 %v280, %v1094
    %v1096 = vpop.f32.mrb[0].mxu0
    %v1097 = vadd.f32 %v284, %v1096
    %v1098 = vpop.f32.mrb[0].mxu0
    %v1099 = vadd.f32 %v280, %v1098
    %v1100 = vpop.f32.mrb[0].mxu0
    %v1101 = vadd.f32 %v284, %v1100
    %1102 = vdwg.mxu0
    %1103 = vmatprep.subr.bf16.mxu0 %v821
    %1104 = vmatpush1.bf16.msra.mxu0 %v820
    %1105 = vmatprep.subr.bf16.mxu0 %v824
    %1106 = vmatpush1.bf16.msra.mxu0 %v823
    %1107 = vmatprep.subr.bf16.mxu0 %v827
    %1108 = vmatpush1.bf16.msra.mxu0 %v826
    %1109 = vmatprep.subr.bf16.mxu0 %v830
    %1110 = vmatpush1.bf16.msra.mxu0 %v829
    %1111 = vmatprep.subr.bf16.mxu0 %v833
    %1112 = vmatpush1.bf16.msra.mxu0 %v832
    %1113 = vmatprep.subr.bf16.mxu0 %v836
    %1114 = vmatpush1.bf16.msra.mxu0 %v835
    %1115 = vmatprep.subr.bf16.mxu0 %v839
    %1116 = vmatpush1.bf16.msra.mxu0 %v838
    %1117 = vmatprep.subr.bf16.mxu0 %v842
    %1118 = vmatpush1.bf16.msra.mxu0 %v841
    %1119 = vmatprep.subr.bf16.mxu0 %v845
    %1120 = vmatpush1.bf16.msra.mxu0 %v844
    %1121 = vmatprep.subr.bf16.mxu0 %v848
    %1122 = vmatpush1.bf16.msra.mxu0 %v847
    %1123 = vmatprep.subr.bf16.mxu0 %v851
    %1124 = vmatpush1.bf16.msra.mxu0 %v850
    %1125 = vmatprep.subr.bf16.mxu0 %v854
    %1126 = vmatpush1.bf16.msra.mxu0 %v853
    %1127 = vmatprep.subr.bf16.mxu0 %v857
    %1128 = vmatpush1.bf16.msra.mxu0 %v856
    %1129 = vmatprep.subr.bf16.mxu0 %v860
    %1130 = vmatpush1.bf16.msra.mxu0 %v859
    %1131 = vmatprep.subr.bf16.mxu0 %v863
    %1132 = vmatpush1.bf16.msra.mxu0 %v862
    %1133 = vmatprep.subr.bf16.mxu0 %v866
    %1134 = vmatpush1.bf16.msra.mxu0 %v865
    %1135 = vmatprep.mubr.bf16.mxu0 %v80
    %1136 = vmatmul.mubr.bf16.gmra.mrb[0].mxu0 %v79
    %v1137 = vpop.f32.mrb[0].mxu0
    %v1138 = vadd.f32 %v1095, %v1137
    %v1139 = vpop.f32.mrb[0].mxu0
    %v1140 = vadd.f32 %v1097, %v1139
    %v1141 = vpop.f32.mrb[0].mxu0
    %v1142 = vadd.f32 %v1099, %v1141
    %v1143 = vpop.f32.mrb[0].mxu0
    %v1144 = vadd.f32 %v1101, %v1143
    %1145 = vdwg.mxu0
    %1146 = vmatprep.subr.bf16.mxu0 %v869
    %1147 = vmatpush1.bf16.msra.mxu0 %v868
    %1148 = vmatprep.subr.bf16.mxu0 %v872
    %1149 = vmatpush1.bf16.msra.mxu0 %v871
    %1150 = vmatprep.subr.bf16.mxu0 %v875
    %1151 = vmatpush1.bf16.msra.mxu0 %v874
    %1152 = vmatprep.subr.bf16.mxu0 %v878
    %1153 = vmatpush1.bf16.msra.mxu0 %v877
    %1154 = vmatprep.subr.bf16.mxu0 %v881
    %1155 = vmatpush1.bf16.msra.mxu0 %v880
    %1156 = vmatprep.subr.bf16.mxu0 %v884
    %1157 = vmatpush1.bf16.msra.mxu0 %v883
    %1158 = vmatprep.subr.bf16.mxu0 %v887
    %1159 = vmatpush1.bf16.msra.mxu0 %v886
    %1160 = vmatprep.subr.bf16.mxu0 %v890
    %1161 = vmatpush1.bf16.msra.mxu0 %v889
    %1162 = vmatprep.subr.bf16.mxu0 %v893
    %1163 = vmatpush1.bf16.msra.mxu0 %v892
    %1164 = vmatprep.subr.bf16.mxu0 %v896
    %1165 = vmatpush1.bf16.msra.mxu0 %v895
    %1166 = vmatprep.subr.bf16.mxu0 %v899
    %1167 = vmatpush1.bf16.msra.mxu0 %v898
    %1168 = vmatprep.subr.bf16.mxu0 %v902
    %1169 = vmatpush1.bf16.msra.mxu0 %v901
    %1170 = vmatprep.subr.bf16.mxu0 %v905
    %1171 = vmatpush1.bf16.msra.mxu0 %v904
    %1172 = vmatprep.subr.bf16.mxu0 %v908
    %1173 = vmatpush1.bf16.msra.mxu0 %v907
    %1174 = vmatprep.subr.bf16.mxu0 %v911
    %1175 = vmatpush1.bf16.msra.mxu0 %v910
    %1176 = vmatprep.subr.bf16.mxu0 %v914
    %1177 = vmatpush1.bf16.msra.mxu0 %v913
    %1178 = vmatprep.mubr.bf16.mxu0 %v82
    %1179 = vmatmul.mubr.bf16.gmra.mrb[0].mxu0 %v81
    %v1180 = vpop.f32.mrb[0].mxu0
    %v1181 = vadd.f32 %v1138, %v1180
    %v1182 = vpop.f32.mrb[0].mxu0
    %v1183 = vadd.f32 %v1140, %v1182
    %v1184 = vpop.f32.mrb[0].mxu0
    %v1185 = vadd.f32 %v1142, %v1184
    %v1186 = vpop.f32.mrb[0].mxu0
    %v1187 = vadd.f32 %v1144, %v1186
    %1188 = vdwg.mxu0
    %1189 = vmatprep.subr.bf16.mxu0 0
    %1190 = vmatpush1.bf16.msra.mxu0 %v774
    %1191 = vmatprep.subr.bf16.mxu0 0
    %1192 = vmatpush1.bf16.msra.mxu0 %v777
    %1193 = vmatprep.subr.bf16.mxu0 0
    %1194 = vmatpush1.bf16.msra.mxu0 %v780
    %1195 = vmatprep.subr.bf16.mxu0 0
    %1196 = vmatpush1.bf16.msra.mxu0 %v783
    %1197 = vmatprep.subr.bf16.mxu0 0
    %1198 = vmatpush1.bf16.msra.mxu0 %v786
    %1199 = vmatprep.subr.bf16.mxu0 0
    %1200 = vmatpush1.bf16.msra.mxu0 %v789
    %1201 = vmatprep.subr.bf16.mxu0 0
    %1202 = vmatpush1.bf16.msra.mxu0 %v792
    %1203 = vmatprep.subr.bf16.mxu0 0
    %1204 = vmatpush1.bf16.msra.mxu0 %v795
    %1205 = vmatprep.subr.bf16.mxu0 0
    %1206 = vmatpush1.bf16.msra.mxu0 %v798
    %1207 = vmatprep.subr.bf16.mxu0 0
    %1208 = vmatpush1.bf16.msra.mxu0 %v801
    %1209 = vmatprep.subr.bf16.mxu0 0
    %1210 = vmatpush1.bf16.msra.mxu0 %v804
    %1211 = vmatprep.subr.bf16.mxu0 0
    %1212 = vmatpush1.bf16.msra.mxu0 %v807
    %1213 = vmatprep.subr.bf16.mxu0 0
    %1214 = vmatpush1.bf16.msra.mxu0 %v810
    %1215 = vmatprep.subr.bf16.mxu0 0
    %1216 = vmatpush1.bf16.msra.mxu0 %v813
    %1217 = vmatprep.subr.bf16.mxu0 0
    %1218 = vmatpush1.bf16.msra.mxu0 %v816
    %1219 = vmatprep.subr.bf16.mxu0 0
    %1220 = vmatpush1.bf16.msra.mxu0 %v819
    %1221 = vmatprep.mubr.bf16.mxu0 %v78
    %1222 = vmatmul.mubr.bf16.gmra.mrb[0].mxu0 %v77
    %v1223 = vpop.f32.mrb[0].mxu0
    %v1224 = vadd.f32 %v288, %v1223
    %v1225 = vpop.f32.mrb[0].mxu0
    %v1226 = vpop.f32.mrb[0].mxu0
    %v1227 = vadd.f32 %v288, %v1226
    %v1228 = vpop.f32.mrb[0].mxu0
    %1229 = vdwg.mxu0
    %1230 = vmatprep.subr.bf16.mxu0 0
    %1231 = vmatpush1.bf16.msra.mxu0 %v822
    %1232 = vmatprep.subr.bf16.mxu0 0
    %1233 = vmatpush1.bf16.msra.mxu0 %v825
    %1234 = vmatprep.subr.bf16.mxu0 0
    %1235 = vmatpush1.bf16.msra.mxu0 %v828
    %1236 = vmatprep.subr.bf16.mxu0 0
    %1237 = vmatpush1.bf16.msra.mxu0 %v831
    %1238 = vmatprep.subr.bf16.mxu0 0
    %1239 = vmatpush1.bf16.msra.mxu0 %v834
    %1240 = vmatprep.subr.bf16.mxu0 0
    %1241 = vmatpush1.bf16.msra.mxu0 %v837
    %1242 = vmatprep.subr.bf16.mxu0 0
    %1243 = vmatpush1.bf16.msra.mxu0 %v840
    %1244 = vmatprep.subr.bf16.mxu0 0
    %1245 = vmatpush1.bf16.msra.mxu0 %v843
    %1246 = vmatprep.subr.bf16.mxu0 0
    %1247 = vmatpush1.bf16.msra.mxu0 %v846
    %1248 = vmatprep.subr.bf16.mxu0 0
    %1249 = vmatpush1.bf16.msra.mxu0 %v849
    %1250 = vmatprep.subr.bf16.mxu0 0
    %1251 = vmatpush1.bf16.msra.mxu0 %v852
    %1252 = vmatprep.subr.bf16.mxu0 0
    %1253 = vmatpush1.bf16.msra.mxu0 %v855
    %1254 = vmatprep.subr.bf16.mxu0 0
    %1255 = vmatpush1.bf16.msra.mxu0 %v858
    %1256 = vmatprep.subr.bf16.mxu0 0
    %1257 = vmatpush1.bf16.msra.mxu0 %v861
    %1258 = vmatprep.subr.bf16.mxu0 0
    %1259 = vmatpush1.bf16.msra.mxu0 %v864
    %1260 = vmatprep.subr.bf16.mxu0 0
    %1261 = vmatpush1.bf16.msra.mxu0 %v867
    %1262 = vmatprep.mubr.bf16.mxu0 %v80
    %1263 = vmatmul.mubr.bf16.gmra.mrb[0].mxu0 %v79
    %v1264 = vpop.f32.mrb[0].mxu0
    %v1265 = vadd.f32 %v1224, %v1264
    %v1266 = vpop.f32.mrb[0].mxu0
    %v1267 = vpop.f32.mrb[0].mxu0
    %v1268 = vadd.f32 %v1227, %v1267
    %v1269 = vpop.f32.mrb[0].mxu0
    %1270 = vdwg.mxu0
    %1271 = vmatprep.subr.bf16.mxu0 0
    %1272 = vmatpush1.bf16.msra.mxu0 %v870
    %1273 = vmatprep.subr.bf16.mxu0 0
    %1274 = vmatpush1.bf16.msra.mxu0 %v873
    %1275 = vmatprep.subr.bf16.mxu0 0
    %1276 = vmatpush1.bf16.msra.mxu0 %v876
    %1277 = vmatprep.subr.bf16.mxu0 0
    %1278 = vmatpush1.bf16.msra.mxu0 %v879
    %1279 = vmatprep.subr.bf16.mxu0 0
    %1280 = vmatpush1.bf16.msra.mxu0 %v882
    %1281 = vmatprep.subr.bf16.mxu0 0
    %1282 = vmatpush1.bf16.msra.mxu0 %v885
    %1283 = vmatprep.subr.bf16.mxu0 0
    %1284 = vmatpush1.bf16.msra.mxu0 %v888
    %1285 = vmatprep.subr.bf16.mxu0 0
    %1286 = vmatpush1.bf16.msra.mxu0 %v891
    %1287 = vmatprep.subr.bf16.mxu0 0
    %1288 = vmatpush1.bf16.msra.mxu0 %v894
    %1289 = vmatprep.subr.bf16.mxu0 0
    %1290 = vmatpush1.bf16.msra.mxu0 %v897
    %1291 = vmatprep.subr.bf16.mxu0 0
    %1292 = vmatpush1.bf16.msra.mxu0 %v900
    %1293 = vmatprep.subr.bf16.mxu0 0
    %1294 = vmatpush1.bf16.msra.mxu0 %v903
    %1295 = vmatprep.subr.bf16.mxu0 0
    %1296 = vmatpush1.bf16.msra.mxu0 %v906
    %1297 = vmatprep.subr.bf16.mxu0 0
    %1298 = vmatpush1.bf16.msra.mxu0 %v909
    %1299 = vmatprep.subr.bf16.mxu0 0
    %1300 = vmatpush1.bf16.msra.mxu0 %v912
    %1301 = vmatprep.subr.bf16.mxu0 0
    %1302 = vmatpush1.bf16.msra.mxu0 %v915
    %1303 = vmatprep.mubr.bf16.mxu0 %v82
    %1304 = vmatmul.mubr.bf16.gmra.mrb[0].mxu0 %v81
    %v1305 = vpop.f32.mrb[0].mxu0
    %v1306 = vadd.f32 %v1265, %v1305
    %v1307 = vpop.f32.mrb[0].mxu0
    %v1308 = vpop.f32.mrb[0].mxu0
    %v1309 = vadd.f32 %v1268, %v1308
    %v1310 = vpop.f32.mrb[0].mxu0
    %1311 = vdwg.mxu0
    %v1312 = vmax.f32 %v1181, 0.0
    %v1313 = vmax.f32 %v1183, 0.0
    %v1314 = vmax.f32 %v1306, 0.0
    %v1315 = vmax.f32 %v1185, 0.0
    %v1316 = vmax.f32 %v1187, 0.0
    %v1317 = vmax.f32 %v1309, 0.0
    %v1318 = vpack.c.bf16 %v1315, %v1312
    %v1319 = vpack.c.bf16 %v1316, %v1313
    %v1320 = vpack.c.bf16 %v1317, %v1314
    %v1321 = vld [vmem:[#allocation6] sm:$0xf]
    %v1322 = vld [vmem:[#allocation6 + $0x4] sm:$0xf]
    %v1323 = vld [vmem:[#allocation6 + $0x8] sm:$0xf]
    %v1324 = vld [vmem:[#allocation6 + $0xc] sm:$0xf]
    %v1325 = vld [vmem:[#allocation6 + $0x10] sm:$0xf]
    %v1326 = vld [vmem:[#allocation6 + $0x14] sm:$0xf]
    %v1327 = vld [vmem:[#allocation6 + $0x18] sm:$0xf]
    %v1328 = vld [vmem:[#allocation6 + $0x1c] sm:$0xf]
    %v1329 = vld [vmem:[#allocation6 + $0x20] sm:$0xf]
    %v1330 = vld [vmem:[#allocation6 + $0x24] sm:$0xf]
    %v1331 = vld [vmem:[#allocation6 + $0x28] sm:$0xf]
    %v1332 = vld [vmem:[#allocation6 + $0x2c] sm:$0xf]
    %v1333 = vld [vmem:[#allocation6 + $0x30] sm:$0xf]
    %v1334 = vld [vmem:[#allocation6 + $0x34] sm:$0xf]
    %v1335 = vld [vmem:[#allocation6 + $0x38] sm:$0xf]
    %v1336 = vld [vmem:[#allocation6 + $0x3c] sm:$0xf]
    %v1337 = vld [vmem:[#allocation6 + $0x40] sm:$0xf]
    %v1338 = vld [vmem:[#allocation6 + $0x44] sm:$0xf]
    %v1339 = vld [vmem:[#allocation6 + $0x48] sm:$0xf]
    %v1340 = vld [vmem:[#allocation6 + $0x4c] sm:$0xf]
    %v1341 = vld [vmem:[#allocation6 + $0x50] sm:$0xf]
    %v1342 = vld [vmem:[#allocation6 + $0x54] sm:$0xf]
    %v1343 = vld [vmem:[#allocation6 + $0x58] sm:$0xf]
    %v1344 = vld [vmem:[#allocation6 + $0x5c] sm:$0xf]
    %v1345 = vld [vmem:[#allocation6 + $0x60] sm:$0xf]
    %v1346 = vld [vmem:[#allocation6 + $0x64] sm:$0xf]
    %v1347 = vld [vmem:[#allocation6 + $0x68] sm:$0xf]
    %v1348 = vld [vmem:[#allocation6 + $0x6c] sm:$0xf]
    %v1349 = vld [vmem:[#allocation6 + $0x70] sm:$0xf]
    %v1350 = vld [vmem:[#allocation6 + $0x74] sm:$0xf]
    %v1351 = vld [vmem:[#allocation6 + $0x78] sm:$0xf]
    %v1352 = vld [vmem:[#allocation6 + $0x7c] sm:$0xf]
    %v1353 = vld [vmem:[#allocation6 + $0x80] sm:$0xf]
    %v1354 = vld [vmem:[#allocation6 + $0x84] sm:$0xf]
    %v1355 = vld [vmem:[#allocation6 + $0x88] sm:$0xf]
    %v1356 = vld [vmem:[#allocation6 + $0x8c] sm:$0xf]
    %v1357 = vld [vmem:[#allocation6 + $0x90] sm:$0xf]
    %v1358 = vld [vmem:[#allocation6 + $0x94] sm:$0xf]
    %v1359 = vld [vmem:[#allocation6 + $0x98] sm:$0xf]
    %v1360 = vld [vmem:[#allocation6 + $0x9c] sm:$0xf]
    %v1361 = vld [vmem:[#allocation6 + $0xa0] sm:$0xf]
    %v1362 = vld [vmem:[#allocation6 + $0xa4] sm:$0xf]
    %v1363 = vld [vmem:[#allocation6 + $0xa8] sm:$0xf]
    %v1364 = vld [vmem:[#allocation6 + $0xac] sm:$0xf]
    %v1365 = vld [vmem:[#allocation6 + $0xb0] sm:$0xf]
    %v1366 = vld [vmem:[#allocation6 + $0xb4] sm:$0xf]
    %v1367 = vld [vmem:[#allocation6 + $0xb8] sm:$0xf]
    %v1368 = vld [vmem:[#allocation6 + $0xbc] sm:$0xf]
    %v1369 = vld [vmem:[%s4] sm:$0x1]
    %v1371 = vlaneseq
    %v1372 = vshrl.u32 %v1371, 7
    %v1373 = vsub.s32 0, %v1372
    %v1374 = vrot.slane %v1369, %v1373
    %v1424 = vunpack.c.l.b16 %v1321
    %v1425 = vunpack.c.l.b16 %v1322
    %v1426 = vunpack.c.l.b16 %v1323
    %v1427 = vunpack.c.l.b16 %v1324
    %v1428 = vunpack.c.l.b16 %v1325
    %v1429 = vunpack.c.l.b16 %v1326
    %v1430 = vunpack.c.l.b16 %v1327
    %v1431 = vunpack.c.l.b16 %v1328
    %v1432 = vunpack.c.l.b16 %v1329
    %v1433 = vunpack.c.l.b16 %v1330
    %v1434 = vunpack.c.l.b16 %v1331
    %v1435 = vunpack.c.l.b16 %v1332
    %v1436 = vunpack.c.l.b16 %v1333
    %v1437 = vunpack.c.l.b16 %v1334
    %v1438 = vunpack.c.l.b16 %v1335
    %v1439 = vunpack.c.l.b16 %v1336
    %v1440 = vunpack.c.l.b16 %v1337
    %v1441 = vunpack.c.l.b16 %v1338
    %v1442 = vunpack.c.l.b16 %v1339
    %v1443 = vunpack.c.l.b16 %v1340
    %v1444 = vunpack.c.l.b16 %v1341
    %v1445 = vunpack.c.l.b16 %v1342
    %v1446 = vunpack.c.l.b16 %v1343
    %v1447 = vunpack.c.l.b16 %v1344
    %v1448 = vunpack.c.l.b16 %v1345
    %v1449 = vunpack.c.l.b16 %v1346
    %v1450 = vunpack.c.l.b16 %v1347
    %v1451 = vunpack.c.l.b16 %v1348
    %v1452 = vunpack.c.l.b16 %v1349
    %v1453 = vunpack.c.l.b16 %v1350
    %v1454 = vunpack.c.l.b16 %v1351
    %v1455 = vunpack.c.l.b16 %v1352
    %v1456 = vunpack.c.l.b16 %v1353
    %v1457 = vunpack.c.l.b16 %v1354
    %v1458 = vunpack.c.l.b16 %v1355
    %v1459 = vunpack.c.l.b16 %v1356
    %v1460 = vunpack.c.l.b16 %v1357
    %v1461 = vunpack.c.l.b16 %v1358
    %v1462 = vunpack.c.l.b16 %v1359
    %v1463 = vunpack.c.l.b16 %v1360
    %v1464 = vunpack.c.l.b16 %v1361
    %v1465 = vunpack.c.l.b16 %v1362
    %v1466 = vunpack.c.l.b16 %v1363
    %v1467 = vunpack.c.l.b16 %v1364
    %v1468 = vunpack.c.l.b16 %v1365
    %v1469 = vunpack.c.l.b16 %v1366
    %v1470 = vunpack.c.l.b16 %v1367
    %v1471 = vunpack.c.l.b16 %v1368
    %v1472 = vpack.c.b16 %v1425, %v1424
    %v1473 = vpack.c.b16 %v1427, %v1426
    %v1474 = vpack.c.b16 %v1429, %v1428
    %v1475 = vpack.c.b16 %v1431, %v1430
    %v1476 = vpack.c.b16 %v1433, %v1432
    %v1477 = vpack.c.b16 %v1435, %v1434
    %v1478 = vpack.c.b16 %v1437, %v1436
    %v1479 = vpack.c.b16 %v1439, %v1438
    %v1480 = vpack.c.b16 %v1441, %v1440
    %v1481 = vpack.c.b16 %v1443, %v1442
    %v1482 = vpack.c.b16 %v1445, %v1444
    %v1483 = vpack.c.b16 %v1447, %v1446
    %v1484 = vpack.c.b16 %v1449, %v1448
    %v1485 = vpack.c.b16 %v1451, %v1450
    %v1486 = vpack.c.b16 %v1453, %v1452
    %v1487 = vpack.c.b16 %v1455, %v1454
    %v1488 = vpack.c.b16 %v1457, %v1456
    %v1489 = vpack.c.b16 %v1459, %v1458
    %v1490 = vpack.c.b16 %v1461, %v1460
    %v1491 = vpack.c.b16 %v1463, %v1462
    %v1492 = vpack.c.b16 %v1465, %v1464
    %v1493 = vpack.c.b16 %v1467, %v1466
    %v1494 = vpack.c.b16 %v1469, %v1468
    %v1495 = vpack.c.b16 %v1471, %v1470
    %1520 = vmatprep.subr.bf16.mxu0 0
    %1521 = vmatpush1.bf16.msra.mxu0 %v1472
    %1522 = vmatprep.subr.bf16.mxu0 0
    %1523 = vmatpush1.bf16.msra.mxu0 %v1473
    %1524 = vmatprep.subr.bf16.mxu0 0
    %1525 = vmatpush1.bf16.msra.mxu0 %v1474
    %1526 = vmatprep.subr.bf16.mxu0 0
    %1527 = vmatpush1.bf16.msra.mxu0 %v1475
    %1528 = vmatprep.subr.bf16.mxu0 0
    %1529 = vmatpush1.bf16.msra.mxu0 %v1476
    %1530 = vmatprep.subr.bf16.mxu0 0
    %1531 = vmatpush1.bf16.msra.mxu0 %v1477
    %1532 = vmatprep.subr.bf16.mxu0 0
    %1533 = vmatpush1.bf16.msra.mxu0 %v1478
    %1534 = vmatprep.subr.bf16.mxu0 0
    %1535 = vmatpush1.bf16.msra.mxu0 %v1479
    %1536 = vmatprep.subr.bf16.mxu0 0
    %1537 = vmatpush1.bf16.msra.mxu0 %v1480
    %1538 = vmatprep.subr.bf16.mxu0 0
    %1539 = vmatpush1.bf16.msra.mxu0 %v1481
    %1540 = vmatprep.subr.bf16.mxu0 0
    %1541 = vmatpush1.bf16.msra.mxu0 %v1482
    %1542 = vmatprep.subr.bf16.mxu0 0
    %1543 = vmatpush1.bf16.msra.mxu0 %v1483
    %1544 = vmatprep.subr.bf16.mxu0 0
    %1545 = vmatpush1.bf16.msra.mxu0 %v1484
    %1546 = vmatprep.subr.bf16.mxu0 0
    %1547 = vmatpush1.bf16.msra.mxu0 %v1485
    %1548 = vmatprep.subr.bf16.mxu0 0
    %1549 = vmatpush1.bf16.msra.mxu0 %v1486
    %1550 = vmatprep.subr.bf16.mxu0 0
    %1551 = vmatpush1.bf16.msra.mxu0 %v1487
    %1552 = vmatprep.mubr.bf16.mxu0 %v1319
    %1553 = vmatmul.mubr.bf16.gmra.mrb[0].mxu0 %v1318
    %v1554 = vpop.f32.mrb[0].mxu0
    %v1555 = vadd.f32 %v1374, %v1554
    %v1556 = vpop.f32.mrb[0].mxu0
    %v1557 = vpop.f32.mrb[0].mxu0
    %v1558 = vadd.f32 %v1374, %v1557
    %v1559 = vpop.f32.mrb[0].mxu0
    %1560 = vdwg.mxu0
    %1561 = vmatprep.subr.bf16.mxu0 0
    %1562 = vmatpush1.bf16.msra.mxu0 %v1488
    %1563 = vmatprep.subr.bf16.mxu0 0
    %1564 = vmatpush1.bf16.msra.mxu0 %v1489
    %1565 = vmatprep.subr.bf16.mxu0 0
    %1566 = vmatpush1.bf16.msra.mxu0 %v1490
    %1567 = vmatprep.subr.bf16.mxu0 0
    %1568 = vmatpush1.bf16.msra.mxu0 %v1491
    %1569 = vmatprep.subr.bf16.mxu0 0
    %1570 = vmatpush1.bf16.msra.mxu0 %v1492
    %1571 = vmatprep.subr.bf16.mxu0 0
    %1572 = vmatpush1.bf16.msra.mxu0 %v1493
    %1573 = vmatprep.subr.bf16.mxu0 0
    %1574 = vmatpush1.bf16.msra.mxu0 %v1494
    %1575 = vmatprep.subr.bf16.mxu0 0
    %1576 = vmatpush1.bf16.msra.mxu0 %v1495
    %1577 = vmatprep.subr.bf16.mxu0 0
    %1578 = vmatpush1.bf16.msra.mxu0 0
    %1579 = vmatprep.subr.bf16.mxu0 0
    %1580 = vmatpush1.bf16.msra.mxu0 0
    %1581 = vmatprep.subr.bf16.mxu0 0
    %1582 = vmatpush1.bf16.msra.mxu0 0
    %1583 = vmatprep.subr.bf16.mxu0 0
    %1584 = vmatpush1.bf16.msra.mxu0 0
    %1585 = vmatprep.subr.bf16.mxu0 0
    %1586 = vmatpush1.bf16.msra.mxu0 0
    %1587 = vmatprep.subr.bf16.mxu0 0
    %1588 = vmatpush1.bf16.msra.mxu0 0
    %1589 = vmatprep.subr.bf16.mxu0 0
    %1590 = vmatpush1.bf16.msra.mxu0 0
    %1591 = vmatprep.subr.bf16.mxu0 0
    %1592 = vmatpush1.bf16.msra.mxu0 0
    %1593 = vmatprep.mubr.bf16.mxu0 0
    %1594 = vmatmul.mubr.bf16.gmra.mrb[0].mxu0 %v1320
    %v1595 = vpop.f32.mrb[0].mxu0
    %v1596 = vadd.f32 %v1555, %v1595
    %v1597 = vpop.f32.mrb[0].mxu0
    %v1598 = vpop.f32.mrb[0].mxu0
    %v1599 = vadd.f32 %v1558, %v1598
    %v1600 = vpop.f32.mrb[0].mxu0
    %1601 = vdwg.mxu0
    %v1602 = vmax.f32 %v1596, 0.0
    %v1603 = vmax.f32 %v1599, 0.0
    %v1604 = vld [vmem:[%s5] sm:$0x1]
    %v1606 = vlaneseq
    %v1607 = vshrl.u32 %v1606, 7
    %v1608 = vsub.s32 0, %v1607
    %v1609 = vrot.slane %v1604, %v1608
    %v1611 = vmul.f32 %v1602, %v1609
    %v1612 = vmul.f32 %v1603, %v1609
    %1613 = vadd.xlane.f32.xlu0 %v1611
    %v1614 = vpop.xlane.xlu0 %1613
    %1615 = vadd.xlane.f32.xlu0 %v1612
    %v1616 = vpop.xlane.xlu0 %1615
    %v1617 = vxor.u32 %v1614, 2147483648
    %v1618 = vxor.u32 %v1616, 2147483648
    %v1619 = vmul.f32 %v1617, 1.442695
    %v1620 = vpow.pop %v1619
    %v1621 = vmul.f32 %v1618, 1.442695
    %v1622 = vpow.pop %v1621
    %v1623 = vadd.f32 %v1620, 1.0
    %v1624 = vadd.f32 %v1622, 1.0
    %v1625 = vrcp.pop %v1623
    %v1626 = vmul.f32 1.0, %v1625
    %v1627 = vrcp.pop %v1624
    %v1628 = vmul.f32 1.0, %v1627
    %vm1629 = vcmask 7168
    %1630 = vst.msk [vmem:[%s6] sm:$0xff] %vm1629, %v1626
    %1631 = vst.msk [vmem:[%s6 + $0x8] sm:$0xff] %vm1629, %v1628
    // Predicated region
    $region38: #{tpu_custom_call.1} parent=1 // pred_check
      _
    $region39: #{tpu_custom_call.1} parent=1 // pred_check_branch
      %1633 = sbr.rel (0) target = $region41
    $region40: #{tpu_custom_call.1} parent=1 // pred_region
      _
    $region41: #{tpu_custom_call.1} parent=1 // pred_fallthru
      _
    // Predicated region
    $region42: #{tpu_custom_call.1} parent=1 // pred_check
      _
    $region43: #{tpu_custom_call.1} parent=1 // pred_check_branch
      %1635 = sbr.rel (0) target = $region45
    $region44: #{tpu_custom_call.1} parent=1 // pred_region
      _
    $region45: #{tpu_custom_call.1} parent=1 // pred_fallthru
      _
    %1636 = vsyncpa [#allocation3], 1
    %1637 = vsyncpa [#allocation5], 1

</llo_original>
